<compile_context>
chip_gen: v5e
topology: v5e:2x2
jax: 0.10.0
libtpu: 0.0.40
codegen_flags: <defaults>
</compile_context>

<pallas_src>
import jax
import jax.numpy as jnp
from jax.experimental import pallas as pl
from jax.experimental.pallas import tpu as pltpu


# ----------------------------- Pallas kernels ------------------------------

def _prop_layer_kernel(x_ref, w_ref, acc_in_ref, y_ref, acc_out_ref, acc_vmem):
    """One tiled step of  y^T = x^T @ W  with f32 accumulation.

    Grid: (N_out // tn, K // tk); the k (reduction) axis is last / "arbitrary".
      x^T tile:   (D, tk)  bf16   layer-l embeddings, transposed (lane-dense)
      W tile:     (tk, tn) bf16   bipartite graph block (Rn or Rn^T)
      acc_in/out: (D, tn)  f32    running light_out sum (aliased in-place)
      y:          (D, tn)  bf16   layer-(l+1) embeddings (input of next layer)
    """
    k = pl.program_id(1)

    @pl.when(k == 0)
    def _():
        acc_vmem[...] = jnp.zeros_like(acc_vmem)

    acc_vmem[...] += jnp.dot(
        x_ref[...], w_ref[...], preferred_element_type=jnp.float32
    )

    @pl.when(k == pl.num_programs(1) - 1)
    def _():
        y = acc_vmem[...]
        y_ref[...] = y.astype(y_ref.dtype)          # bf16 copy for next layer
        acc_out_ref[...] = acc_in_ref[...] + y       # f32 running light_out


def _score_kernel(u_ref, i_ref, out_ref):
    """gamma[b] = sum_d u[d, b] * i[d, b] -- reduce over sublanes, B on lanes."""
    out_ref[...] = jnp.sum(u_ref[...] * i_ref[...], axis=0, keepdims=True)


# ------------------------------ wrappers ------------------------------------

def _tile(dim: int, target: int) -> int:
    """Largest tile <= target that divides dim (full-dim fallback)."""
    t = min(target, dim)
    if dim % t == 0:
        return t
    # TODO(synk): pad ragged N up to a tile multiple instead of falling back to
    # a single full-dim block (only matters for awkward graph sizes).
    return dim


def _propagate_matmul(x_bf16_t, w_bf16, acc_in, *, tn, tk):
    """y^T (D, N_out) = x^T (D, K) @ W (K, N_out);  acc_out = acc_in + y^T."""
    d, k_dim = x_bf16_t.shape
    k_dim2, n_out = w_bf16.shape
    assert k_dim == k_dim2 and acc_in.shape == (d, n_out)
    grid = (n_out // tn, k_dim // tk)

    cost = pl.CostEstimate(
        flops=2 * d * k_dim * n_out,
        transcendentals=0,
        bytes_accessed=(x_bf16_t.size * 2 * (n_out // tn)  # x^T re-streamed per column tile
                        + w_bf16.size * 2                  # graph block streamed once (bf16)
                        + d * n_out * (4 + 2 + 4)),         # acc_in read + y (bf16) + acc_out written
    )

    y_bf16, acc_out = pl.pallas_call(
        _prop_layer_kernel,
        out_shape=(
            jax.ShapeDtypeStruct((d, n_out), jnp.bfloat16),
            jax.ShapeDtypeStruct((d, n_out), jnp.float32),
        ),
        grid_spec=pltpu.PrefetchScalarGridSpec(
            num_scalar_prefetch=0,
            grid=grid,
            in_specs=[
                pl.BlockSpec((d, tk), lambda j, k: (0, k)),    # x^T tile (bf16)
                pl.BlockSpec((tk, tn), lambda j, k: (k, j)),   # graph tile (bf16)
                pl.BlockSpec((d, tn), lambda j, k: (0, j)),    # running light_out (in)
            ],
            out_specs=[
                pl.BlockSpec((d, tn), lambda j, k: (0, j)),    # new layer embeddings (bf16)
                pl.BlockSpec((d, tn), lambda j, k: (0, j)),    # running light_out (out)
            ],
            scratch_shapes=[pltpu.VMEM((d, tn), jnp.float32)],
        ),
        compiler_params=pltpu.CompilerParams(
            dimension_semantics=("parallel", "arbitrary"),
        ),
        input_output_aliases={2: 1},   # acc_in -> acc_out (in-place running sum)
        cost_estimate=cost,
    )(x_bf16_t, w_bf16, acc_in)
    return y_bf16, acc_out


def lightgcn_computer(r_bf16, rt_bf16, user_table, item_table, *,
                      n_layers=3, tn_target=512, tk_target=512):
    """LightGCN computer(): returns (light_users^T (D, nu), light_items^T (D, ni))."""
    eu_t = user_table.T.astype(jnp.float32)    # (D, nu), lane-dense
    ei_t = item_table.T.astype(jnp.float32)    # (D, ni)
    nu = eu_t.shape[1]
    ni = ei_t.shape[1]

    acc_u = eu_t                               # running sum starts with ego embeddings
    acc_i = ei_t
    eu_bf = eu_t.astype(jnp.bfloat16)          # bf16 operands streamed to the MXU
    ei_bf = ei_t.astype(jnp.bfloat16)

    tn_u, tk_u = _tile(nu, tn_target), _tile(nu, tk_target)
    tn_i, tk_i = _tile(ni, tn_target), _tile(ni, tk_target)

    # TODO(synk): the graph block is dense here; a truly sparse Rn would need a
    # scalar-prefetch / gather-based kernel (torch.sparse.mm in the original).
    for _ in range(n_layers):
        # e_{l+1,users}^T = e_{l,items}^T @ Rn^T ; e_{l+1,items}^T = e_{l,users}^T @ Rn
        new_eu_bf, acc_u = _propagate_matmul(ei_bf, rt_bf16, acc_u, tn=tn_u, tk=tk_i)
        new_ei_bf, acc_i = _propagate_matmul(eu_bf, r_bf16, acc_i, tn=tn_i, tk=tk_u)
        eu_bf, ei_bf = new_eu_bf, new_ei_bf

    scale = 1.0 / float(n_layers + 1)
    # TODO(synk): for forward() alone the scale could be folded into the final
    # (B,) scores instead of two full-table passes.
    return acc_u * scale, acc_i * scale


def _score(u_t, i_t):
    d, b = u_t.shape
    out = pl.pallas_call(
        _score_kernel,
        out_shape=jax.ShapeDtypeStruct((1, b), jnp.float32),
        in_specs=[pl.BlockSpec((d, b), lambda: (0, 0)),
                  pl.BlockSpec((d, b), lambda: (0, 0))],
        out_specs=pl.BlockSpec((1, b), lambda: (0, 0)),
    )(u_t, i_t)
    return out[0]


def lightgcn_forward(r_bf16, rt_bf16, user_table, item_table, users, items, *,
                     n_layers=3, tn_target=512, tk_target=512):
    """Equivalent of LightGCN.forward(users, items) -> gamma (B,)."""
    light_u_t, light_i_t = lightgcn_computer(
        r_bf16, rt_bf16, user_table, item_table,
        n_layers=n_layers, tn_target=tn_target, tk_target=tk_target)

    # gather is pure indexing glue; scoring stays a (tiny) Pallas kernel.
    u_t = light_u_t[:, users]   # (D, B)
    i_t = light_i_t[:, items]   # (D, B)
    # TODO(synk): at batch sizes this small the pallas_call launch overhead
    # dominates; for production fuse gather+score via scalar prefetch or leave
    # this reduction to XLA.
    return _score(u_t, i_t)


# --------------------------- references (pure JAX) ---------------------------

_HI = jax.lax.Precision.HIGHEST


def _reference_forward_f32(r_norm, user_table, item_table, users, items, n_layers=3):
    eu, ei = user_table, item_table
    acc_u, acc_i = eu, ei
    for _ in range(n_layers):
        new_eu = jnp.dot(r_norm, ei, precision=_HI)
        new_ei = jnp.dot(r_norm.T, eu, precision=_HI)
        eu, ei = new_eu, new_ei
        acc_u = acc_u + eu
        acc_i = acc_i + ei
    s = 1.0 / (n_layers + 1)
    lu, li = acc_u * s, acc_i * s
    return jnp.sum(lu[users] * li[items], axis=1)


def _reference_forward_bf16(r_bf16, user_table, item_table, users, items, n_layers=3):
    """Same math as the kernels: bf16 graph + bf16 matmul operands, f32 accumulation."""
    rf = r_bf16.astype(jnp.float32)
    eu, ei = user_table, item_table
    acc_u, acc_i = eu, ei
    for _ in range(n_layers):
        euq = eu.astype(jnp.bfloat16).astype(jnp.float32)
        eiq = ei.astype(jnp.bfloat16).astype(jnp.float32)
        new_eu = jnp.dot(rf, eiq, precision=_HI)
        new_ei = jnp.dot(rf.T, euq, precision=_HI)
        eu, ei = new_eu, new_ei
        acc_u = acc_u + eu
        acc_i = acc_i + ei
    s = 1.0 / (n_layers + 1)
    lu, li = acc_u * s, acc_i * s
    return jnp.sum(lu[users] * li[items], axis=1)


# --------------------------------- main --------------------------------------

if __name__ == "__main__":
    # synthetic config (mirrors LightGCN.__init_weight); sizes kept small but
    # large enough that the tiled grid (2x2 per matmul) is actually exercised.
    num_users = 512
    num_items = 512
    latent_dim = 64          # config['latent_dim_rec']
    n_layers = 3             # config['lightGCN_n_layers']
    batch = 8

    key = jax.random.PRNGKey(0)
    k_u, k_i, k_r, k_qu, k_qi = jax.random.split(key, 5)

    # nn.init.normal_(std=0.1) embedding tables
    user_table = (0.1 * jax.random.normal(k_u, (num_users, latent_dim))).astype(jnp.float32)
    item_table = (0.1 * jax.random.normal(k_i, (num_items, latent_dim))).astype(jnp.float32)

    # deterministic synthetic bipartite graph; symmetric sqrt-degree normalization
    # as in dataset.getSparseGraph():  G = D^-1/2 [[0, R],[R^T, 0]] D^-1/2.
    # Only the nonzero block Rn (and its transpose) is materialized.
    R = (jax.random.uniform(k_r, (num_users, num_items)) < 0.05).astype(jnp.float32)
    deg_u = jnp.sum(R, axis=1)
    deg_i = jnp.sum(R, axis=0)
    du = jnp.where(deg_u > 0, 1.0 / jnp.sqrt(jnp.maximum(deg_u, 1e-12)), 0.0)
    di = jnp.where(deg_i > 0, 1.0 / jnp.sqrt(jnp.maximum(deg_i, 1e-12)), 0.0)
    r_norm = R * du[:, None] * di[None, :]

    r_bf16 = r_norm.astype(jnp.bfloat16)        # (nu, ni) graph block for the MXU
    rt_bf16 = r_norm.T.astype(jnp.bfloat16)     # (ni, nu)

    users = jax.random.randint(k_qu, (batch,), 0, num_users, dtype=jnp.int32)
    items = jax.random.randint(k_qi, (batch,), 0, num_items, dtype=jnp.int32)

    fwd = jax.jit(lightgcn_forward,
                  static_argnames=("n_layers", "tn_target", "tk_target"))
    gamma = fwd(r_bf16, rt_bf16, user_table, item_table, users, items,
                n_layers=n_layers, tn_target=256, tk_target=256)
    gamma = jax.block_until_ready(gamma)
    assert gamma.shape == (batch,)

    # math-matched reference (same bf16 quantization of operands, f32 accumulation)
    ref_q = _reference_forward_bf16(r_bf16, user_table, item_table, users, items, n_layers)
    assert jnp.allclose(gamma, ref_q, atol=2e-3, rtol=2e-3), (gamma, ref_q)

    # sanity check against the full-f32 reference (allows bf16 graph drift)
    ref_f = _reference_forward_f32(r_norm, user_table, item_table, users, items, n_layers)
    assert jnp.allclose(gamma, ref_f, atol=5e-2, rtol=5e-2), (gamma, ref_f)

    print("KERNEL_OK")
</pallas_src>

<mosaic_0001>
module attributes {stable_mosaic.version = 11 : i64} {
  func.func @_prop_layer_kernel(%arg0: i32, %arg1: i32, %arg2: memref<64x256xbf16, #tpu.memory_space<vmem>>, %arg3: memref<256x256xbf16, #tpu.memory_space<vmem>>, %arg4: memref<64x256xf32, #tpu.memory_space<vmem>>, %arg5: memref<64x256xbf16, #tpu.memory_space<vmem>>, %arg6: memref<64x256xf32, #tpu.memory_space<vmem>>, %arg7: memref<64x256xf32, #tpu.memory_space<vmem>>) attributes {dimension_semantics = [#tpu.dimension_semantics<parallel>, #tpu.dimension_semantics<arbitrary>], iteration_bounds = array<i64: 2, 2>, scalar_prefetch = 0 : i64, scratch_operands = 1 : i64, tpu.core_type = #tpu.core_type<tc>, window_params = [{transform_indices = @transform_0, window_bounds = array<i64: 64, 256>}, {transform_indices = @transform_1, window_bounds = array<i64: 256, 256>}, {transform_indices = @transform_2, window_bounds = array<i64: 64, 256>}, {transform_indices = @transform_3, window_bounds = array<i64: 64, 256>}, {transform_indices = @transform_4, window_bounds = array<i64: 64, 256>}]} {
    %c0_i32 = arith.constant 0 : i32
    %0 = arith.cmpi eq, %arg1, %c0_i32 : i32
    %1 = arith.extui %0 : i1 to i32
    %c0_i32_0 = arith.constant 0 : i32
    %2 = arith.cmpi ne, %1, %c0_i32_0 : i32
    scf.if %2 {
      %cst_9 = arith.constant 0.000000e+00 : f32
      %12 = vector.broadcast %cst_9 : f32 to vector<64x256xf32>
      %c0_10 = arith.constant 0 : index
      %c0_11 = arith.constant 0 : index
      %13 = vector.load %arg7[%c0_10, %c0_11] : memref<64x256xf32, #tpu.memory_space<vmem>>, vector<64x256xf32>
      tpu.vector_store %arg7[%c0_10, %c0_11], %12 {strides = array<i32>} : memref<64x256xf32, #tpu.memory_space<vmem>>, vector<64x256xf32>,
    } else {
    }
    %c0 = arith.constant 0 : index
    %c0_1 = arith.constant 0 : index
    %3 = vector.load %arg7[%c0, %c0_1] : memref<64x256xf32, #tpu.memory_space<vmem>>, vector<64x256xf32>
    %c0_2 = arith.constant 0 : index
    %c0_3 = arith.constant 0 : index
    %4 = vector.load %arg2[%c0_2, %c0_3] : memref<64x256xbf16, #tpu.memory_space<vmem>>, vector<64x256xbf16>
    %c0_4 = arith.constant 0 : index
    %c0_5 = arith.constant 0 : index
    %5 = vector.load %arg3[%c0_4, %c0_5] : memref<256x256xbf16, #tpu.memory_space<vmem>>, vector<256x256xbf16>
    %cst = arith.constant dense<0.000000e+00> : vector<64x256xf32>
    %6 = tpu.matmul %4, %5, %cst {dimension_numbers = #tpu.dot_dimension_numbers<[1], [0], [0], [1], [0, 0, 1, 1], [], []>} : vector<64x256xbf16>, vector<256x256xbf16>, vector<64x256xf32> -> vector<64x256xf32>
    %7 = arith.addf %3, %6 : vector<64x256xf32>
    %c0_6 = arith.constant 0 : index
    %c0_7 = arith.constant 0 : index
    %8 = vector.load %arg7[%c0_6, %c0_7] : memref<64x256xf32, #tpu.memory_space<vmem>>, vector<64x256xf32>
    tpu.vector_store %arg7[%c0_6, %c0_7], %7 {strides = array<i32>} : memref<64x256xf32, #tpu.memory_space<vmem>>, vector<64x256xf32>,
    %c1_i32 = arith.constant 1 : i32
    %9 = arith.cmpi eq, %arg1, %c1_i32 : i32
    %10 = arith.extui %9 : i1 to i32
    %c0_i32_8 = arith.constant 0 : i32
    %11 = arith.cmpi ne, %10, %c0_i32_8 : i32
    scf.if %11 {
      %c0_9 = arith.constant 0 : index
      %c0_10 = arith.constant 0 : index
      %12 = vector.load %arg7[%c0_9, %c0_10] : memref<64x256xf32, #tpu.memory_space<vmem>>, vector<64x256xf32>
      %13 = arith.truncf %12 : vector<64x256xf32> to vector<64x256xbf16>
      %c0_11 = arith.constant 0 : index
      %c0_12 = arith.constant 0 : index
      %14 = vector.load %arg5[%c0_11, %c0_12] : memref<64x256xbf16, #tpu.memory_space<vmem>>, vector<64x256xbf16>
      tpu.vector_store %arg5[%c0_11, %c0_12], %13 {strides = array<i32>} : memref<64x256xbf16, #tpu.memory_space<vmem>>, vector<64x256xbf16>,
      %c0_13 = arith.constant 0 : index
      %c0_14 = arith.constant 0 : index
      %15 = vector.load %arg4[%c0_13, %c0_14] : memref<64x256xf32, #tpu.memory_space<vmem>>, vector<64x256xf32>
      %16 = arith.addf %15, %12 : vector<64x256xf32>
      %c0_15 = arith.constant 0 : index
      %c0_16 = arith.constant 0 : index
      %17 = vector.load %arg6[%c0_15, %c0_16] : memref<64x256xf32, #tpu.memory_space<vmem>>, vector<64x256xf32>
      tpu.vector_store %arg6[%c0_15, %c0_16], %16 {strides = array<i32>} : memref<64x256xf32, #tpu.memory_space<vmem>>, vector<64x256xf32>,
    } else {
    }
    return
  }
  func.func @transform_0(%arg0: i32, %arg1: i32) -> (i32, i32) {
    %c0_i32 = arith.constant 0 : i32
    %c0_i32_0 = arith.constant 0 : i32
    return %c0_i32, %arg1 : i32, i32
  }
  func.func @transform_1(%arg0: i32, %arg1: i32) -> (i32, i32) {
    %c0_i32 = arith.constant 0 : i32
    return %arg1, %arg0 : i32, i32
  }
  func.func @transform_2(%arg0: i32, %arg1: i32) -> (i32, i32) {
    %c0_i32 = arith.constant 0 : i32
    %c0_i32_0 = arith.constant 0 : i32
    return %c0_i32, %arg0 : i32, i32
  }
  func.func @transform_3(%arg0: i32, %arg1: i32) -> (i32, i32) {
    %c0_i32 = arith.constant 0 : i32
    %c0_i32_0 = arith.constant 0 : i32
    return %c0_i32, %arg0 : i32, i32
  }
  func.func @transform_4(%arg0: i32, %arg1: i32) -> (i32, i32) {
    %c0_i32 = arith.constant 0 : i32
    %c0_i32_0 = arith.constant 0 : i32
    return %c0_i32, %arg0 : i32, i32
  }
}

module attributes {stable_mosaic.version = 11 : i64} {
  func.func @_prop_layer_kernel(%arg0: i32, %arg1: i32, %arg2: memref<64x256xbf16, #tpu.memory_space<vmem>>, %arg3: memref<256x256xbf16, #tpu.memory_space<vmem>>, %arg4: memref<64x256xf32, #tpu.memory_space<vmem>>, %arg5: memref<64x256xbf16, #tpu.memory_space<vmem>>, %arg6: memref<64x256xf32, #tpu.memory_space<vmem>>, %arg7: memref<64x256xf32, #tpu.memory_space<vmem>>) attributes {dimension_semantics = [#tpu.dimension_semantics<parallel>, #tpu.dimension_semantics<arbitrary>], iteration_bounds = array<i64: 2, 2>, scalar_prefetch = 0 : i64, scratch_operands = 1 : i64, tpu.core_type = #tpu.core_type<tc>, window_params = [{transform_indices = @transform_0, window_bounds = array<i64: 64, 256>}, {transform_indices = @transform_1, window_bounds = array<i64: 256, 256>}, {transform_indices = @transform_2, window_bounds = array<i64: 64, 256>}, {transform_indices = @transform_3, window_bounds = array<i64: 64, 256>}, {transform_indices = @transform_4, window_bounds = array<i64: 64, 256>}]} {
    %c0_i32 = arith.constant 0 : i32
    %0 = arith.cmpi eq, %arg1, %c0_i32 : i32
    %1 = arith.extui %0 : i1 to i32
    %c0_i32_0 = arith.constant 0 : i32
    %2 = arith.cmpi ne, %1, %c0_i32_0 : i32
    scf.if %2 {
      %cst_9 = arith.constant 0.000000e+00 : f32
      %12 = vector.broadcast %cst_9 : f32 to vector<64x256xf32>
      %c0_10 = arith.constant 0 : index
      %c0_11 = arith.constant 0 : index
      %13 = vector.load %arg7[%c0_10, %c0_11] : memref<64x256xf32, #tpu.memory_space<vmem>>, vector<64x256xf32>
      tpu.vector_store %arg7[%c0_10, %c0_11], %12 {strides = array<i32>} : memref<64x256xf32, #tpu.memory_space<vmem>>, vector<64x256xf32>,
    } else {
    }
    %c0 = arith.constant 0 : index
    %c0_1 = arith.constant 0 : index
    %3 = vector.load %arg7[%c0, %c0_1] : memref<64x256xf32, #tpu.memory_space<vmem>>, vector<64x256xf32>
    %c0_2 = arith.constant 0 : index
    %c0_3 = arith.constant 0 : index
    %4 = vector.load %arg2[%c0_2, %c0_3] : memref<64x256xbf16, #tpu.memory_space<vmem>>, vector<64x256xbf16>
    %c0_4 = arith.constant 0 : index
    %c0_5 = arith.constant 0 : index
    %5 = vector.load %arg3[%c0_4, %c0_5] : memref<256x256xbf16, #tpu.memory_space<vmem>>, vector<256x256xbf16>
    %cst = arith.constant dense<0.000000e+00> : vector<64x256xf32>
    %6 = tpu.matmul %4, %5, %cst {dimension_numbers = #tpu.dot_dimension_numbers<[1], [0], [0], [1], [0, 0, 1, 1], [], []>} : vector<64x256xbf16>, vector<256x256xbf16>, vector<64x256xf32> -> vector<64x256xf32>
    %7 = arith.addf %3, %6 : vector<64x256xf32>
    %c0_6 = arith.constant 0 : index
    %c0_7 = arith.constant 0 : index
    %8 = vector.load %arg7[%c0_6, %c0_7] : memref<64x256xf32, #tpu.memory_space<vmem>>, vector<64x256xf32>
    tpu.vector_store %arg7[%c0_6, %c0_7], %7 {strides = array<i32>} : memref<64x256xf32, #tpu.memory_space<vmem>>, vector<64x256xf32>,
    %c1_i32 = arith.constant 1 : i32
    %9 = arith.cmpi eq, %arg1, %c1_i32 : i32
    %10 = arith.extui %9 : i1 to i32
    %c0_i32_8 = arith.constant 0 : i32
    %11 = arith.cmpi ne, %10, %c0_i32_8 : i32
    scf.if %11 {
      %c0_9 = arith.constant 0 : index
      %c0_10 = arith.constant 0 : index
      %12 = vector.load %arg7[%c0_9, %c0_10] : memref<64x256xf32, #tpu.memory_space<vmem>>, vector<64x256xf32>
      %13 = arith.truncf %12 : vector<64x256xf32> to vector<64x256xbf16>
      %c0_11 = arith.constant 0 : index
      %c0_12 = arith.constant 0 : index
      %14 = vector.load %arg5[%c0_11, %c0_12] : memref<64x256xbf16, #tpu.memory_space<vmem>>, vector<64x256xbf16>
      tpu.vector_store %arg5[%c0_11, %c0_12], %13 {strides = array<i32>} : memref<64x256xbf16, #tpu.memory_space<vmem>>, vector<64x256xbf16>,
      %c0_13 = arith.constant 0 : index
      %c0_14 = arith.constant 0 : index
      %15 = vector.load %arg4[%c0_13, %c0_14] : memref<64x256xf32, #tpu.memory_space<vmem>>, vector<64x256xf32>
      %16 = arith.addf %15, %12 : vector<64x256xf32>
      %c0_15 = arith.constant 0 : index
      %c0_16 = arith.constant 0 : index
      %17 = vector.load %arg6[%c0_15, %c0_16] : memref<64x256xf32, #tpu.memory_space<vmem>>, vector<64x256xf32>
      tpu.vector_store %arg6[%c0_15, %c0_16], %16 {strides = array<i32>} : memref<64x256xf32, #tpu.memory_space<vmem>>, vector<64x256xf32>,
    } else {
    }
    return
  }
  func.func @transform_0(%arg0: i32, %arg1: i32) -> (i32, i32) {
    %c0_i32 = arith.constant 0 : i32
    %c0_i32_0 = arith.constant 0 : i32
    return %c0_i32, %arg1 : i32, i32
  }
  func.func @transform_1(%arg0: i32, %arg1: i32) -> (i32, i32) {
    %c0_i32 = arith.constant 0 : i32
    return %arg1, %arg0 : i32, i32
  }
  func.func @transform_2(%arg0: i32, %arg1: i32) -> (i32, i32) {
    %c0_i32 = arith.constant 0 : i32
    %c0_i32_0 = arith.constant 0 : i32
    return %c0_i32, %arg0 : i32, i32
  }
  func.func @transform_3(%arg0: i32, %arg1: i32) -> (i32, i32) {
    %c0_i32 = arith.constant 0 : i32
    %c0_i32_0 = arith.constant 0 : i32
    return %c0_i32, %arg0 : i32, i32
  }
  func.func @transform_4(%arg0: i32, %arg1: i32) -> (i32, i32) {
    %c0_i32 = arith.constant 0 : i32
    %c0_i32_0 = arith.constant 0 : i32
    return %c0_i32, %arg0 : i32, i32
  }
}

module attributes {stable_mosaic.version = 11 : i64} {
  func.func @_score_kernel(%arg0: memref<64x8xf32, #tpu.memory_space<vmem>>, %arg1: memref<64x8xf32, #tpu.memory_space<vmem>>, %arg2: memref<1x8xf32, #tpu.memory_space<vmem>>) attributes {dimension_semantics = [], scalar_prefetch = 0 : i64, scratch_operands = 0 : i64, tpu.core_type = #tpu.core_type<tc>} {
    %c0 = arith.constant 0 : index
    %c0_0 = arith.constant 0 : index
    %0 = vector.load %arg0[%c0, %c0_0] : memref<64x8xf32, #tpu.memory_space<vmem>>, vector<64x8xf32>
    %c0_1 = arith.constant 0 : index
    %c0_2 = arith.constant 0 : index
    %1 = vector.load %arg1[%c0_1, %c0_2] : memref<64x8xf32, #tpu.memory_space<vmem>>, vector<64x8xf32>
    %2 = arith.mulf %0, %1 : vector<64x8xf32>
    %cst = arith.constant dense<0.000000e+00> : vector<8xf32>
    %3 = vector.multi_reduction <add>, %2, %cst [0] : vector<64x8xf32> to vector<8xf32>
    %4 = vector.shape_cast %3 : vector<8xf32> to vector<1x8xf32>
    %c0_3 = arith.constant 0 : index
    %c0_4 = arith.constant 0 : index
    %5 = vector.load %arg2[%c0_3, %c0_4] : memref<1x8xf32, #tpu.memory_space<vmem>>, vector<1x8xf32>
    tpu.vector_store %arg2[%c0_3, %c0_4], %4 {strides = array<i32>} : memref<1x8xf32, #tpu.memory_space<vmem>>, vector<1x8xf32>,
    return
  }
}

</mosaic_0001>

<llo_original>
// kernel: lightgcn_forward.13
$region0: #{lightgcn_forward.13}
  #allocation0 [shape = 'u32[]', space=smem, size = 0x4, offset = 0x4, fixed_abs, tag = 'smem constant byte address 0x4 - core index']
  #allocation1 [shape = 'u32[72,128]{1,0:T(1,128)}', space=vmem, size = 0x9000, scoped, tag = 'internal scratch']
  %s0 = inlined_call_operand.vmem [shape: f32[64,8], index: 0, kind: input, shape index: {}]
  %s1 = inlined_call_operand.vmem [shape: f32[64,8], index: 1, kind: input, shape index: {}]
  %s2 = inlined_call_operand.hbm [shape: f32[1,8], index: 2, kind: output, shape index: {}]
  %s3 = sld [smem:[#allocation0]]
  $region18: #{lightgcn_forward.13} parent=0
    _
  %s5 = ssub.s32 1, %s3
  %s6 = scalar_select 0, %s5, %s3
  $region1: #{lightgcn_forward.13} parent=0
    #allocation2 [shape = 'u8[512]{0}', space=vmem, size = 0x400, scoped, tag = 'output window, operand 0, single buffered']
    #allocation3 [shape = 's32[1]{0}', space=sflag, size = 0x4, scoped, tag = 'scoped memory for lightgcn_forward.13']
    %7 = vsyncpa [#allocation3], 0
    // Predicated region
    $region2: #{lightgcn_forward.13} parent=1 // pred_check
      _
    $region3: #{lightgcn_forward.13} parent=1 // pred_check_branch
      %9 = sbr.rel (0) target = $region5
    $region4: #{lightgcn_forward.13} parent=1 // pred_region
      _
    $region5: #{lightgcn_forward.13} parent=1 // pred_fallthru
      _
    // Predicated region
    $region6: #{lightgcn_forward.13} parent=1 // pred_check
      _
    $region7: #{lightgcn_forward.13} parent=1 // pred_check_branch
      %11 = sbr.rel (0) target = $region9
    $region8: #{lightgcn_forward.13} parent=1 // pred_region
      _
    $region9: #{lightgcn_forward.13} parent=1 // pred_fallthru
      _
    %v12 = vld [vmem:[%s0] sm:$0xff]
    %v13 = vld [vmem:[%s0 + $0x8] sm:$0xff]
    %v14 = vld [vmem:[%s0 + $0x10] sm:$0xff]
    %v15 = vld [vmem:[%s0 + $0x18] sm:$0xff]
    %v16 = vld [vmem:[%s0 + $0x20] sm:$0xff]
    %v17 = vld [vmem:[%s0 + $0x28] sm:$0xff]
    %v18 = vld [vmem:[%s0 + $0x30] sm:$0xff]
    %v19 = vld [vmem:[%s0 + $0x38] sm:$0xff]
    %v20 = vld [vmem:[%s1] sm:$0xff]
    %v21 = vld [vmem:[%s1 + $0x8] sm:$0xff]
    %v22 = vld [vmem:[%s1 + $0x10] sm:$0xff]
    %v23 = vld [vmem:[%s1 + $0x18] sm:$0xff]
    %v24 = vld [vmem:[%s1 + $0x20] sm:$0xff]
    %v25 = vld [vmem:[%s1 + $0x28] sm:$0xff]
    %v26 = vld [vmem:[%s1 + $0x30] sm:$0xff]
    %v27 = vld [vmem:[%s1 + $0x38] sm:$0xff]
    %v28 = vmul.f32 %v12, %v20
    %v29 = vmul.f32 %v13, %v21
    %v30 = vmul.f32 %v14, %v22
    %v31 = vmul.f32 %v15, %v23
    %v32 = vmul.f32 %v16, %v24
    %v33 = vmul.f32 %v17, %v25
    %v34 = vmul.f32 %v18, %v26
    %v35 = vmul.f32 %v19, %v27
    %vm36 = vcmask 64512
    %v37 = vsel %vm36, %v28, 0.0
    %v38 = vsel %vm36, %v29, 0.0
    %v39 = vadd.f32 %v37, %v38
    %v40 = vsel %vm36, %v30, 0.0
    %v41 = vadd.f32 %v39, %v40
    %v42 = vsel %vm36, %v31, 0.0
    %v43 = vadd.f32 %v41, %v42
    %v44 = vsel %vm36, %v32, 0.0
    %v45 = vadd.f32 %v43, %v44
    %v46 = vsel %vm36, %v33, 0.0
    %v47 = vadd.f32 %v45, %v46
    %v48 = vsel %vm36, %v34, 0.0
    %v49 = vadd.f32 %v47, %v48
    %v50 = vsel %vm36, %v35, 0.0
    %v51 = vadd.f32 %v49, %v50
    %v52 = vrot.slane %v51, 4
    %v53 = vadd.f32 %v51, %v52
    %v54 = vrot.slane %v53, 2
    %v55 = vadd.f32 %v53, %v54
    %v56 = vrot.slane %v55, 1
    %v57 = vadd.f32 %v55, %v56
    %vm58 = vcmask 57344
    %59 = vst.msk [vmem:[#allocation2] sm:$0x1] %vm58, %v57
    // Predicated region
    $region10: #{lightgcn_forward.13} parent=1 // pred_check
      _
    $region11: #{lightgcn_forward.13} parent=1 // pred_check_branch
      %61 = sbr.rel (0) target = $region13
    $region12: #{lightgcn_forward.13} parent=1 // pred_region
      %63 = vsyncadd [#allocation3], 0
      %s65 = sshll.u32 [#allocation2], 4
      %s66 = int_to_ptr.vmem [resolvable:$true] %s65
      %s67 = sshll.u32 %s2, 4
      %s68 = int_to_ptr.hbm [resolvable:$true] %s67
      %70 = dma.vmem_to_hbm [thread:$0]  %s66, 16, %s68, [#allocation3]
    $region13: #{lightgcn_forward.13} parent=1 // pred_fallthru
      _
    // Predicated region
    $region14: #{lightgcn_forward.13} parent=1 // pred_check
      _
    $region15: #{lightgcn_forward.13} parent=1 // pred_check_branch
      %72 = sbr.rel (0) target = $region17
    $region16: #{lightgcn_forward.13} parent=1 // pred_region
      %74 = dma.done [#allocation3], 16
    $region17: #{lightgcn_forward.13} parent=1 // pred_fallthru
      _
    %75 = vsyncpa [#allocation3], 1

// kernel: lightgcn_forward.12
$region0: #{lightgcn_forward.12}
  #allocation0 [shape = 'u32[]', space=smem, size = 0x4, offset = 0x4, fixed_abs, tag = 'smem constant byte address 0x4 - core index']
  #allocation1 [shape = 'u32[72,128]{1,0:T(1,128)}', space=vmem, size = 0x9000, scoped, tag = 'internal scratch']
  #allocation2 [shape = 'f32[64,256]{1,0:T(8,128)}', space=vmem, size = 0x10000, scoped, tag = 'scratch operand']
  %s0 = inlined_call_operand.vmem [shape: bf16[64,512], index: 0, kind: input, shape index: {}]
  %s1 = inlined_call_operand.vmem [shape: bf16[512,512], index: 1, kind: input, shape index: {}]
  %s2 = inlined_call_operand.vmem [shape: f32[64,512], index: 2, kind: input, shape index: {}, may-alias: {2,4}]
  %s3 = inlined_call_operand.hbm [shape: bf16[64,512], index: 3, kind: output, shape index: {0}]
  %s4 = inlined_call_operand.vmem [shape: f32[64,512], index: 4, kind: output, shape index: {1}, may-alias: {2,4}]
  %5 = xla_tuple %s3, %s4
  %s6 = sld [smem:[#allocation0]]
  $region179: #{lightgcn_forward.12} parent=0
    _
  %s8 = ssub.s32 1, %s6
  %s9 = scalar_select 0, %s8, %s6
  $region1: #{lightgcn_forward.12} parent=0
    #allocation3 [shape = 'u8[65536]{0}', space=vmem, size = 0x10000, scoped, tag = 'input window, operand 0']
    #allocation4 [shape = 'u8[262144]{0}', space=vmem, size = 0x40000, scoped, tag = 'input window, operand 1']
    #allocation5 [shape = 'u8[131072]{0}', space=vmem, size = 0x20000, scoped, tag = 'input window, operand 2']
    #allocation6 [shape = 'u8[65536]{0}', space=vmem, size = 0x10000, scoped, tag = 'output window, operand 0']
    #allocation7 [shape = 's32[2]{0}', space=sflag, size = 0x8, scoped, tag = 'scoped memory for lightgcn_forward.12']
    #allocation8 [shape = 'u8[131072]{0}', space=vmem, size = 0x20000, scoped, tag = 'output window, operand 1']
    %10 = vsyncpa [#allocation7], 0
    %s11 = scalar_lea.sflag [#allocation7], 1
    %12 = vsyncpa %s11, 0
    loop: start=0, step=1, limit=6
    $region2: #{lightgcn_forward.12} parent=1 // loop_pre_header
      _
    $region3: #{lightgcn_forward.12} parent=1 // loop_header
      %s14 = sphi 0, %s18
      %p15 = scmp.ge.s32.totalorder %s14, 6
      %s21 = sphi 0, %s33
      %s22 = sphi 0, %s29
      %s23 = sphi 0, %s21
      %s24 = sphi 0, %s22
      %s25 = sphi 0, %s23
      %s26 = sphi 0, %s24
      %s36 = sphi 0, %s38
      %s39 = sphi 0, %s36
      %s40 = sphi 0, %s39
      %s56 = sphi 0, %s40
      %s64 = sphi 0, %s66
      %s67 = sphi 0, %s64
      %s68 = sphi 0, %s67
      %s84 = sphi 0, %s68
      %s90 = sphi 0, %s92
      %s93 = sphi 0, %s90
      %s94 = sphi 0, %s93
      %s110 = sphi 0, %s94
      %s116 = sphi 0, %s118
      %s119 = sphi 0, %s116
      %s120 = sphi 0, %s119
      %s136 = sphi 0, %s120
      %s142 = sphi 0, %s144
      %s145 = sphi 0, %s142
      %s146 = sphi 0, %s145
      %s162 = sphi 0, %s146
    $region4: #{lightgcn_forward.12} parent=1 // loop_header_branch
      %17 = sbr.rel (%p15) target = $region8
    $region5: #{lightgcn_forward.12} parent=1 // loop_body
      %s19 = ssub.s32 %s14, 1
      %s20 = ssub.s32 %s14, 2
      %s27 = sadd.s32 1, %s22
      %p28 = scmp.ge.s32.totalorder %s27, 2
      %s29 = scalar_select %p28, 0, %s27
      %s30 = sadd.s32 1, %s21
      %s31 = scalar_select %p28, %s30, %s21
      %p32 = scmp.ge.s32.totalorder %s31, 2
      %s33 = scalar_select %p32, 0, %s31
      %s34 = ssub.s32 %s22, %s29
      %p35 = scmp.eq.s32.totalorder %s34, 0
      %s37 = sadd.s32 %s36, 1
      %s38 = scalar_select %p35, %s36, %s37
      %p41 = pneg %p35
      %p42 = scmp.eq.s32.totalorder %s14, 3
      %p43 = por %p41, %p42
      %p44 = scmp.ne.s32.totalorder %s36, %s39
      %p45 = scmp.eq.s32.totalorder %s14, 0
      %p46 = por %p44, %p45
      %p47 = scmp.ne.s32.totalorder %s36, %s39
      %p48 = scmp.eq.s32.totalorder %s19, 3
      %p49 = por %p47, %p48
      %p50 = scmp.ne.s32.totalorder %s39, %s40
      %p51 = scmp.eq.s32.totalorder %s19, 0
      %p52 = por %p50, %p51
      %p53 = scmp.ne.s32.totalorder %s39, %s40
      %p54 = scmp.eq.s32.totalorder %s20, 3
      %p55 = por %p53, %p54
      %p57 = scmp.ne.s32.totalorder %s40, %s56
      %p58 = scmp.eq.s32.totalorder %s20, 0
      %p59 = por %p57, %p58
      %s60 = ssub.s32 %s22, %s29
      %s61 = ssub.s32 %s21, %s33
      %s62 = sor.u32 %s60, %s61
      %p63 = scmp.eq.s32.totalorder %s62, 0
      %s65 = sadd.s32 %s64, 1
      %s66 = scalar_select %p63, %s64, %s65
      %p69 = pneg %p63
      %p70 = scmp.eq.s32.totalorder %s14, 3
      %p71 = por %p69, %p70
      %p72 = scmp.ne.s32.totalorder %s64, %s67
      %p73 = scmp.eq.s32.totalorder %s14, 0
      %p74 = por %p72, %p73
      %p75 = scmp.ne.s32.totalorder %s64, %s67
      %p76 = scmp.eq.s32.totalorder %s19, 3
      %p77 = por %p75, %p76
      %p78 = scmp.ne.s32.totalorder %s67, %s68
      %p79 = scmp.eq.s32.totalorder %s19, 0
      %p80 = por %p78, %p79
      %p81 = scmp.ne.s32.totalorder %s67, %s68
      %p82 = scmp.eq.s32.totalorder %s20, 3
      %p83 = por %p81, %p82
      %p85 = scmp.ne.s32.totalorder %s68, %s84
      %p86 = scmp.eq.s32.totalorder %s20, 0
      %p87 = por %p85, %p86
      %s88 = ssub.s32 %s21, %s33
      %p89 = scmp.eq.s32.totalorder %s88, 0
      %s91 = sadd.s32 %s90, 1
      %s92 = scalar_select %p89, %s90, %s91
      %p95 = pneg %p89
      %p96 = scmp.eq.s32.totalorder %s14, 3
      %p97 = por %p95, %p96
      %p98 = scmp.ne.s32.totalorder %s90, %s93
      %p99 = scmp.eq.s32.totalorder %s14, 0
      %p100 = por %p98, %p99
      %p101 = scmp.ne.s32.totalorder %s90, %s93
      %p102 = scmp.eq.s32.totalorder %s19, 3
      %p103 = por %p101, %p102
      %p104 = scmp.ne.s32.totalorder %s93, %s94
      %p105 = scmp.eq.s32.totalorder %s19, 0
      %p106 = por %p104, %p105
      %p107 = scmp.ne.s32.totalorder %s93, %s94
      %p108 = scmp.eq.s32.totalorder %s20, 3
      %p109 = por %p107, %p108
      %p111 = scmp.ne.s32.totalorder %s94, %s110
      %p112 = scmp.eq.s32.totalorder %s20, 0
      %p113 = por %p111, %p112
      %s114 = ssub.s32 %s21, %s33
      %p115 = scmp.eq.s32.totalorder %s114, 0
      %s117 = sadd.s32 %s116, 1
      %s118 = scalar_select %p115, %s116, %s117
      %p121 = pneg %p115
      %p122 = scmp.eq.s32.totalorder %s14, 3
      %p123 = por %p121, %p122
      %p124 = scmp.ne.s32.totalorder %s116, %s119
      %p125 = scmp.eq.s32.totalorder %s14, 0
      %p126 = por %p124, %p125
      %p127 = scmp.ne.s32.totalorder %s116, %s119
      %p128 = scmp.eq.s32.totalorder %s19, 3
      %p129 = por %p127, %p128
      %p130 = scmp.ne.s32.totalorder %s119, %s120
      %p131 = scmp.eq.s32.totalorder %s19, 0
      %p132 = por %p130, %p131
      %p133 = scmp.ne.s32.totalorder %s119, %s120
      %p134 = scmp.eq.s32.totalorder %s20, 3
      %p135 = por %p133, %p134
      %p137 = scmp.ne.s32.totalorder %s120, %s136
      %p138 = scmp.eq.s32.totalorder %s20, 0
      %p139 = por %p137, %p138
      %s140 = ssub.s32 %s21, %s33
      %p141 = scmp.eq.s32.totalorder %s140, 0
      %s143 = sadd.s32 %s142, 1
      %s144 = scalar_select %p141, %s142, %s143
      %p147 = pneg %p141
      %p148 = scmp.eq.s32.totalorder %s14, 3
      %p149 = por %p147, %p148
      %p150 = scmp.ne.s32.totalorder %s142, %s145
      %p151 = scmp.eq.s32.totalorder %s14, 0
      %p152 = por %p150, %p151
      %p153 = scmp.ne.s32.totalorder %s142, %s145
      %p154 = scmp.eq.s32.totalorder %s19, 3
      %p155 = por %p153, %p154
      %p156 = scmp.ne.s32.totalorder %s145, %s146
      %p157 = scmp.eq.s32.totalorder %s19, 0
      %p158 = por %p156, %p157
      %p159 = scmp.ne.s32.totalorder %s145, %s146
      %p160 = scmp.eq.s32.totalorder %s20, 3
      %p161 = por %p159, %p160
      %p163 = scmp.ne.s32.totalorder %s146, %s162
      %p164 = scmp.eq.s32.totalorder %s20, 0
      %p165 = por %p163, %p164
      %p166 = scmp.le.s32.totalorder 1, %s14
      %p167 = scmp.lt.s32.totalorder %s14, 5
      %p168 = pnand %p166, %p167
      %p169 = pneg %p168
      // Predicated region
      $region9: #{lightgcn_forward.12} parent=5 // pred_check
        _
      $region10: #{lightgcn_forward.12} parent=5 // pred_check_branch
        %171 = sbr.rel (%p168) target = $region12
      $region11: #{lightgcn_forward.12} parent=5 // pred_region
        %s172 = ssub.s32 %s14, 1
      $region12: #{lightgcn_forward.12} parent=5 // pred_fallthru
        _
      %p173 = scmp.lt.s32.totalorder %s14, 4
      // Predicated region
      $region13: #{lightgcn_forward.12} parent=5 // pred_check
        %p174 = pneg %p173
      $region14: #{lightgcn_forward.12} parent=5 // pred_check_branch
        %176 = sbr.rel (%p174) target = $region16
      $region15: #{lightgcn_forward.12} parent=5 // pred_region
        // Predicated region
        $region17: #{lightgcn_forward.12} parent=15 // pred_check
          %p177 = pneg %p46
        $region18: #{lightgcn_forward.12} parent=15 // pred_check_branch
          %179 = sbr.rel (%p177) target = $region20
        $region19: #{lightgcn_forward.12} parent=15 // pred_region
          %s180 = sand.u32 %s36, 1
          %s181 = sand.u32 %s36, 1
          %s182 = smul.addr %s181, 64
          %s183 = scalar_lea.vmem [#allocation3], %s182
          %s184 = smul.u32 2, %s22
          %s185 = smul.addr %s184, 4
          %s186 = scalar_lea.vmem %s0, %s185
          // Predicated region
          $region21: #{lightgcn_forward.12} parent=19 // pred_check
            _
          $region22: #{lightgcn_forward.12} parent=19 // pred_check_branch
            %188 = sbr.rel (0) target = $region24
          $region23: #{lightgcn_forward.12} parent=19 // pred_region
            // Predicated region
            $region25: #{lightgcn_forward.12} parent=23 // pred_check
              _
            $region26: #{lightgcn_forward.12} parent=23 // pred_check_branch
              %190 = sbr.rel (0) target = $region28
            $region27: #{lightgcn_forward.12} parent=23 // pred_region
              // Predicated region
              $region40: #{lightgcn_forward.12} parent=27 // pred_check
                _
              $region41: #{lightgcn_forward.12} parent=27 // pred_check_branch
                %220 = sbr.rel (0) target = $region43
              $region42: #{lightgcn_forward.12} parent=27 // pred_region
                loop: start=0, step=1, limit=1
                $region44: #{lightgcn_forward.12} parent=42 // loop_pre_header
                  _
                $region45: #{lightgcn_forward.12} parent=42 // loop_header
                  %s222 = sphi 0, %s226
                  %p223 = scmp.ge.s32.totalorder %s222, 1
                  %s227 = sphi %s186, %s186
                  %s228 = sphi %s183, %s183
                $region46: #{lightgcn_forward.12} parent=42 // loop_header_branch
                  %225 = sbr.rel (%p223) target = $region50
                $region47: #{lightgcn_forward.12} parent=42 // loop_body
                  %v229 = vld [vmem:[%s227] sm:$0xff]
                  %230 = vst [vmem:[%s228] sm:$0xff] %v229
                  %v231 = vld [vmem:[%s227 + $0x10] sm:$0xff]
                  %232 = vst [vmem:[%s228 + $0x8] sm:$0xff] %v231
                  %v233 = vld [vmem:[%s227 + $0x20] sm:$0xff]
                  %234 = vst [vmem:[%s228 + $0x10] sm:$0xff] %v233
                  %v235 = vld [vmem:[%s227 + $0x30] sm:$0xff]
                  %236 = vst [vmem:[%s228 + $0x18] sm:$0xff] %v235
                  %v237 = vld [vmem:[%s227 + $0x40] sm:$0xff]
                  %238 = vst [vmem:[%s228 + $0x20] sm:$0xff] %v237
                  %v239 = vld [vmem:[%s227 + $0x50] sm:$0xff]
                  %240 = vst [vmem:[%s228 + $0x28] sm:$0xff] %v239
                  %v241 = vld [vmem:[%s227 + $0x60] sm:$0xff]
                  %242 = vst [vmem:[%s228 + $0x30] sm:$0xff] %v241
                  %v243 = vld [vmem:[%s227 + $0x70] sm:$0xff]
                  %244 = vst [vmem:[%s228 + $0x38] sm:$0xff] %v243
                $region48: #{lightgcn_forward.12} parent=42 // loop_footer
                  %s226 = sadd.s32 1, %s222
                $region49: #{lightgcn_forward.12} parent=42 // loop_footer_branch
                  %221 = sbr.rel target = $region45
                $region50: #{lightgcn_forward.12} parent=42 // loop_exit
                  _
              $region43: #{lightgcn_forward.12} parent=27 // pred_fallthru
                _
              // Predicated region
              $region51: #{lightgcn_forward.12} parent=27 // pred_check
                _
              $region52: #{lightgcn_forward.12} parent=27 // pred_check_branch
                %246 = sbr.rel target = $region54
              $region53: #{lightgcn_forward.12} parent=27 // pred_region
                _
              $region54: #{lightgcn_forward.12} parent=27 // pred_fallthru
                _
            $region28: #{lightgcn_forward.12} parent=23 // pred_fallthru
              _
            // Predicated region
            $region29: #{lightgcn_forward.12} parent=23 // pred_check
              _
            $region30: #{lightgcn_forward.12} parent=23 // pred_check_branch
              %192 = sbr.rel target = $region32
            $region31: #{lightgcn_forward.12} parent=23 // pred_region
              %s194 = ssub.s32 256, 1
              loop: start=0, step=1, limit=1
              $region33: #{lightgcn_forward.12} parent=31 // loop_pre_header
                _
              $region34: #{lightgcn_forward.12} parent=31 // loop_header
                %s196 = sphi 0, %s200
                %p197 = scmp.ge.s32.totalorder %s196, 1
                %s201 = sphi %s186, %s186
                %s202 = sphi %s183, %s183
              $region35: #{lightgcn_forward.12} parent=31 // loop_header_branch
                %199 = sbr.rel (%p197) target = $region39
              $region36: #{lightgcn_forward.12} parent=31 // loop_body
                %v203 = vld [vmem:[%s201] sm:%s194]
                %204 = vst [vmem:[%s202] sm:%s194] %v203
                %v205 = vld [vmem:[%s201 + $0x10] sm:%s194]
                %206 = vst [vmem:[%s202 + $0x8] sm:%s194] %v205
                %v207 = vld [vmem:[%s201 + $0x20] sm:%s194]
                %208 = vst [vmem:[%s202 + $0x10] sm:%s194] %v207
                %v209 = vld [vmem:[%s201 + $0x30] sm:%s194]
                %210 = vst [vmem:[%s202 + $0x18] sm:%s194] %v209
                %v211 = vld [vmem:[%s201 + $0x40] sm:%s194]
                %212 = vst [vmem:[%s202 + $0x20] sm:%s194] %v211
                %v213 = vld [vmem:[%s201 + $0x50] sm:%s194]
                %214 = vst [vmem:[%s202 + $0x28] sm:%s194] %v213
                %v215 = vld [vmem:[%s201 + $0x60] sm:%s194]
                %216 = vst [vmem:[%s202 + $0x30] sm:%s194] %v215
                %v217 = vld [vmem:[%s201 + $0x70] sm:%s194]
                %218 = vst [vmem:[%s202 + $0x38] sm:%s194] %v217
              $region37: #{lightgcn_forward.12} parent=31 // loop_footer
                %s200 = sadd.s32 1, %s196
              $region38: #{lightgcn_forward.12} parent=31 // loop_footer_branch
                %195 = sbr.rel target = $region34
              $region39: #{lightgcn_forward.12} parent=31 // loop_exit
                _
            $region32: #{lightgcn_forward.12} parent=23 // pred_fallthru
              _
          $region24: #{lightgcn_forward.12} parent=19 // pred_fallthru
            _
          %247 = vnop
        $region20: #{lightgcn_forward.12} parent=15 // pred_fallthru
          _
        // Predicated region
        $region55: #{lightgcn_forward.12} parent=15 // pred_check
          %p248 = pneg %p74
        $region56: #{lightgcn_forward.12} parent=15 // pred_check_branch
          %250 = sbr.rel (%p248) target = $region58
        $region57: #{lightgcn_forward.12} parent=15 // pred_region
          %s251 = sand.u32 %s64, 1
          %s252 = sand.u32 %s64, 1
          %s253 = smul.addr %s252, 256
          %s254 = scalar_lea.vmem [#allocation4], %s253
          %s255 = smul.u32 32, %s22
          %s256 = smul.u32 2, %s21
          %s257 = smul.addr %s255, 4
          %s258 = sadd.s32 %s256, %s257
          %s259 = smul.addr %s258, 4
          %s260 = scalar_lea.vmem %s1, %s259
          // Predicated region
          $region59: #{lightgcn_forward.12} parent=57 // pred_check
            _
          $region60: #{lightgcn_forward.12} parent=57 // pred_check_branch
            %262 = sbr.rel (0) target = $region62
          $region61: #{lightgcn_forward.12} parent=57 // pred_region
            // Predicated region
            $region63: #{lightgcn_forward.12} parent=61 // pred_check
              _
            $region64: #{lightgcn_forward.12} parent=61 // pred_check_branch
              %264 = sbr.rel (0) target = $region66
            $region65: #{lightgcn_forward.12} parent=61 // pred_region
              // Predicated region
              $region78: #{lightgcn_forward.12} parent=65 // pred_check
                _
              $region79: #{lightgcn_forward.12} parent=65 // pred_check_branch
                %342 = sbr.rel (0) target = $region81
              $region80: #{lightgcn_forward.12} parent=65 // pred_region
                loop: start=0, step=1, limit=1
                $region82: #{lightgcn_forward.12} parent=80 // loop_pre_header
                  _
                $region83: #{lightgcn_forward.12} parent=80 // loop_header
                  %s344 = sphi 0, %s348
                  %p345 = scmp.ge.s32.totalorder %s344, 1
                  %s349 = sphi %s260, %s260
                  %s350 = sphi %s254, %s254
                $region84: #{lightgcn_forward.12} parent=80 // loop_header_branch
                  %347 = sbr.rel (%p345) target = $region88
                $region85: #{lightgcn_forward.12} parent=80 // loop_body
                  %v351 = vld [vmem:[%s349] sm:$0xff]
                  %352 = vst [vmem:[%s350] sm:$0xff] %v351
                  %v353 = vld [vmem:[%s349 + $0x10] sm:$0xff]
                  %354 = vst [vmem:[%s350 + $0x8] sm:$0xff] %v353
                  %v355 = vld [vmem:[%s349 + $0x20] sm:$0xff]
                  %356 = vst [vmem:[%s350 + $0x10] sm:$0xff] %v355
                  %v357 = vld [vmem:[%s349 + $0x30] sm:$0xff]
                  %358 = vst [vmem:[%s350 + $0x18] sm:$0xff] %v357
                  %v359 = vld [vmem:[%s349 + $0x40] sm:$0xff]
                  %360 = vst [vmem:[%s350 + $0x20] sm:$0xff] %v359
                  %v361 = vld [vmem:[%s349 + $0x50] sm:$0xff]
                  %362 = vst [vmem:[%s350 + $0x28] sm:$0xff] %v361
                  %v363 = vld [vmem:[%s349 + $0x60] sm:$0xff]
                  %364 = vst [vmem:[%s350 + $0x30] sm:$0xff] %v363
                  %v365 = vld [vmem:[%s349 + $0x70] sm:$0xff]
                  %366 = vst [vmem:[%s350 + $0x38] sm:$0xff] %v365
                  %v367 = vld [vmem:[%s349 + $0x80] sm:$0xff]
                  %368 = vst [vmem:[%s350 + $0x40] sm:$0xff] %v367
                  %v369 = vld [vmem:[%s349 + $0x90] sm:$0xff]
                  %370 = vst [vmem:[%s350 + $0x48] sm:$0xff] %v369
                  %v371 = vld [vmem:[%s349 + $0xa0] sm:$0xff]
                  %372 = vst [vmem:[%s350 + $0x50] sm:$0xff] %v371
                  %v373 = vld [vmem:[%s349 + $0xb0] sm:$0xff]
                  %374 = vst [vmem:[%s350 + $0x58] sm:$0xff] %v373
                  %v375 = vld [vmem:[%s349 + $0xc0] sm:$0xff]
                  %376 = vst [vmem:[%s350 + $0x60] sm:$0xff] %v375
                  %v377 = vld [vmem:[%s349 + $0xd0] sm:$0xff]
                  %378 = vst [vmem:[%s350 + $0x68] sm:$0xff] %v377
                  %v379 = vld [vmem:[%s349 + $0xe0] sm:$0xff]
                  %380 = vst [vmem:[%s350 + $0x70] sm:$0xff] %v379
                  %v381 = vld [vmem:[%s349 + $0xf0] sm:$0xff]
                  %382 = vst [vmem:[%s350 + $0x78] sm:$0xff] %v381
                  %v383 = vld [vmem:[%s349 + $0x100] sm:$0xff]
                  %384 = vst [vmem:[%s350 + $0x80] sm:$0xff] %v383
                  %v385 = vld [vmem:[%s349 + $0x110] sm:$0xff]
                  %386 = vst [vmem:[%s350 + $0x88] sm:$0xff] %v385
                  %v387 = vld [vmem:[%s349 + $0x120] sm:$0xff]
                  %388 = vst [vmem:[%s350 + $0x90] sm:$0xff] %v387
                  %v389 = vld [vmem:[%s349 + $0x130] sm:$0xff]
                  %390 = vst [vmem:[%s350 + $0x98] sm:$0xff] %v389
                  %v391 = vld [vmem:[%s349 + $0x140] sm:$0xff]
                  %392 = vst [vmem:[%s350 + $0xa0] sm:$0xff] %v391
                  %v393 = vld [vmem:[%s349 + $0x150] sm:$0xff]
                  %394 = vst [vmem:[%s350 + $0xa8] sm:$0xff] %v393
                  %v395 = vld [vmem:[%s349 + $0x160] sm:$0xff]
                  %396 = vst [vmem:[%s350 + $0xb0] sm:$0xff] %v395
                  %v397 = vld [vmem:[%s349 + $0x170] sm:$0xff]
                  %398 = vst [vmem:[%s350 + $0xb8] sm:$0xff] %v397
                  %v399 = vld [vmem:[%s349 + $0x180] sm:$0xff]
                  %400 = vst [vmem:[%s350 + $0xc0] sm:$0xff] %v399
                  %v401 = vld [vmem:[%s349 + $0x190] sm:$0xff]
                  %402 = vst [vmem:[%s350 + $0xc8] sm:$0xff] %v401
                  %v403 = vld [vmem:[%s349 + $0x1a0] sm:$0xff]
                  %404 = vst [vmem:[%s350 + $0xd0] sm:$0xff] %v403
                  %v405 = vld [vmem:[%s349 + $0x1b0] sm:$0xff]
                  %406 = vst [vmem:[%s350 + $0xd8] sm:$0xff] %v405
                  %v407 = vld [vmem:[%s349 + $0x1c0] sm:$0xff]
                  %408 = vst [vmem:[%s350 + $0xe0] sm:$0xff] %v407
                  %v409 = vld [vmem:[%s349 + $0x1d0] sm:$0xff]
                  %410 = vst [vmem:[%s350 + $0xe8] sm:$0xff] %v409
                  %v411 = vld [vmem:[%s349 + $0x1e0] sm:$0xff]
                  %412 = vst [vmem:[%s350 + $0xf0] sm:$0xff] %v411
                  %v413 = vld [vmem:[%s349 + $0x1f0] sm:$0xff]
                  %414 = vst [vmem:[%s350 + $0xf8] sm:$0xff] %v413
                $region86: #{lightgcn_forward.12} parent=80 // loop_footer
                  %s348 = sadd.s32 1, %s344
                $region87: #{lightgcn_forward.12} parent=80 // loop_footer_branch
                  %343 = sbr.rel target = $region83
                $region88: #{lightgcn_forward.12} parent=80 // loop_exit
                  _
              $region81: #{lightgcn_forward.12} parent=65 // pred_fallthru
                _
              // Predicated region
              $region89: #{lightgcn_forward.12} parent=65 // pred_check
                _
              $region90: #{lightgcn_forward.12} parent=65 // pred_check_branch
                %416 = sbr.rel target = $region92
              $region91: #{lightgcn_forward.12} parent=65 // pred_region
                _
              $region92: #{lightgcn_forward.12} parent=65 // pred_fallthru
                _
            $region66: #{lightgcn_forward.12} parent=61 // pred_fallthru
              _
            // Predicated region
            $region67: #{lightgcn_forward.12} parent=61 // pred_check
              _
            $region68: #{lightgcn_forward.12} parent=61 // pred_check_branch
              %266 = sbr.rel target = $region70
            $region69: #{lightgcn_forward.12} parent=61 // pred_region
              %s268 = ssub.s32 256, 1
              loop: start=0, step=1, limit=1
              $region71: #{lightgcn_forward.12} parent=69 // loop_pre_header
                _
              $region72: #{lightgcn_forward.12} parent=69 // loop_header
                %s270 = sphi 0, %s274
                %p271 = scmp.ge.s32.totalorder %s270, 1
                %s275 = sphi %s260, %s260
                %s276 = sphi %s254, %s254
              $region73: #{lightgcn_forward.12} parent=69 // loop_header_branch
                %273 = sbr.rel (%p271) target = $region77
              $region74: #{lightgcn_forward.12} parent=69 // loop_body
                %v277 = vld [vmem:[%s275] sm:%s268]
                %278 = vst [vmem:[%s276] sm:%s268] %v277
                %v279 = vld [vmem:[%s275 + $0x10] sm:%s268]
                %280 = vst [vmem:[%s276 + $0x8] sm:%s268] %v279
                %v281 = vld [vmem:[%s275 + $0x20] sm:%s268]
                %282 = vst [vmem:[%s276 + $0x10] sm:%s268] %v281
                %v283 = vld [vmem:[%s275 + $0x30] sm:%s268]
                %284 = vst [vmem:[%s276 + $0x18] sm:%s268] %v283
                %v285 = vld [vmem:[%s275 + $0x40] sm:%s268]
                %286 = vst [vmem:[%s276 + $0x20] sm:%s268] %v285
                %v287 = vld [vmem:[%s275 + $0x50] sm:%s268]
                %288 = vst [vmem:[%s276 + $0x28] sm:%s268] %v287
                %v289 = vld [vmem:[%s275 + $0x60] sm:%s268]
                %290 = vst [vmem:[%s276 + $0x30] sm:%s268] %v289
                %v291 = vld [vmem:[%s275 + $0x70] sm:%s268]
                %292 = vst [vmem:[%s276 + $0x38] sm:%s268] %v291
                %v293 = vld [vmem:[%s275 + $0x80] sm:%s268]
                %294 = vst [vmem:[%s276 + $0x40] sm:%s268] %v293
                %v295 = vld [vmem:[%s275 + $0x90] sm:%s268]
                %296 = vst [vmem:[%s276 + $0x48] sm:%s268] %v295
                %v297 = vld [vmem:[%s275 + $0xa0] sm:%s268]
                %298 = vst [vmem:[%s276 + $0x50] sm:%s268] %v297
                %v299 = vld [vmem:[%s275 + $0xb0] sm:%s268]
                %300 = vst [vmem:[%s276 + $0x58] sm:%s268] %v299
                %v301 = vld [vmem:[%s275 + $0xc0] sm:%s268]
                %302 = vst [vmem:[%s276 + $0x60] sm:%s268] %v301
                %v303 = vld [vmem:[%s275 + $0xd0] sm:%s268]
                %304 = vst [vmem:[%s276 + $0x68] sm:%s268] %v303
                %v305 = vld [vmem:[%s275 + $0xe0] sm:%s268]
                %306 = vst [vmem:[%s276 + $0x70] sm:%s268] %v305
                %v307 = vld [vmem:[%s275 + $0xf0] sm:%s268]
                %308 = vst [vmem:[%s276 + $0x78] sm:%s268] %v307
                %v309 = vld [vmem:[%s275 + $0x100] sm:%s268]
                %310 = vst [vmem:[%s276 + $0x80] sm:%s268] %v309
                %v311 = vld [vmem:[%s275 + $0x110] sm:%s268]
                %312 = vst [vmem:[%s276 + $0x88] sm:%s268] %v311
                %v313 = vld [vmem:[%s275 + $0x120] sm:%s268]
                %314 = vst [vmem:[%s276 + $0x90] sm:%s268] %v313
                %v315 = vld [vmem:[%s275 + $0x130] sm:%s268]
                %316 = vst [vmem:[%s276 + $0x98] sm:%s268] %v315
                %v317 = vld [vmem:[%s275 + $0x140] sm:%s268]
                %318 = vst [vmem:[%s276 + $0xa0] sm:%s268] %v317
                %v319 = vld [vmem:[%s275 + $0x150] sm:%s268]
                %320 = vst [vmem:[%s276 + $0xa8] sm:%s268] %v319
                %v321 = vld [vmem:[%s275 + $0x160] sm:%s268]
                %322 = vst [vmem:[%s276 + $0xb0] sm:%s268] %v321
                %v323 = vld [vmem:[%s275 + $0x170] sm:%s268]
                %324 = vst [vmem:[%s276 + $0xb8] sm:%s268] %v323
                %v325 = vld [vmem:[%s275 + $0x180] sm:%s268]
                %326 = vst [vmem:[%s276 + $0xc0] sm:%s268] %v325
                %v327 = vld [vmem:[%s275 + $0x190] sm:%s268]
                %328 = vst [vmem:[%s276 + $0xc8] sm:%s268] %v327
                %v329 = vld [vmem:[%s275 + $0x1a0] sm:%s268]
                %330 = vst [vmem:[%s276 + $0xd0] sm:%s268] %v329
                %v331 = vld [vmem:[%s275 + $0x1b0] sm:%s268]
                %332 = vst [vmem:[%s276 + $0xd8] sm:%s268] %v331
                %v333 = vld [vmem:[%s275 + $0x1c0] sm:%s268]
                %334 = vst [vmem:[%s276 + $0xe0] sm:%s268] %v333
                %v335 = vld [vmem:[%s275 + $0x1d0] sm:%s268]
                %336 = vst [vmem:[%s276 + $0xe8] sm:%s268] %v335
                %v337 = vld [vmem:[%s275 + $0x1e0] sm:%s268]
                %338 = vst [vmem:[%s276 + $0xf0] sm:%s268] %v337
                %v339 = vld [vmem:[%s275 + $0x1f0] sm:%s268]
                %340 = vst [vmem:[%s276 + $0xf8] sm:%s268] %v339
              $region75: #{lightgcn_forward.12} parent=69 // loop_footer
                %s274 = sadd.s32 1, %s270
              $region76: #{lightgcn_forward.12} parent=69 // loop_footer_branch
                %269 = sbr.rel target = $region72
              $region77: #{lightgcn_forward.12} parent=69 // loop_exit
                _
            $region70: #{lightgcn_forward.12} parent=61 // pred_fallthru
              _
          $region62: #{lightgcn_forward.12} parent=57 // pred_fallthru
            _
          %417 = vnop
        $region58: #{lightgcn_forward.12} parent=15 // pred_fallthru
          _
        // Predicated region
        $region93: #{lightgcn_forward.12} parent=15 // pred_check
          %p418 = pneg %p100
        $region94: #{lightgcn_forward.12} parent=15 // pred_check_branch
          %420 = sbr.rel (%p418) target = $region96
        $region95: #{lightgcn_forward.12} parent=15 // pred_region
          %s421 = sand.u32 %s90, 1
          %s422 = sand.u32 %s90, 1
          %s423 = smul.addr %s422, 128
          %s424 = scalar_lea.vmem [#allocation5], %s423
          %s425 = smul.u32 2, %s21
          %s426 = smul.addr %s425, 8
          %s427 = scalar_lea.vmem %s2, %s426
          // Predicated region
          $region97: #{lightgcn_forward.12} parent=95 // pred_check
            _
          $region98: #{lightgcn_forward.12} parent=95 // pred_check_branch
            %429 = sbr.rel (0) target = $region100
          $region99: #{lightgcn_forward.12} parent=95 // pred_region
            // Predicated region
            $region101: #{lightgcn_forward.12} parent=99 // pred_check
              _
            $region102: #{lightgcn_forward.12} parent=99 // pred_check_branch
              %431 = sbr.rel (0) target = $region104
            $region103: #{lightgcn_forward.12} parent=99 // pred_region
              loop: start=0, step=1, limit=1
              $region105: #{lightgcn_forward.12} parent=103 // loop_pre_header
                _
              $region106: #{lightgcn_forward.12} parent=103 // loop_header
                %s433 = sphi 0, %s437
                %p434 = scmp.ge.s32.totalorder %s433, 1
                %s438 = sphi %s427, %s427
                %s439 = sphi %s424, %s424
              $region107: #{lightgcn_forward.12} parent=103 // loop_header_branch
                %436 = sbr.rel (%p434) target = $region111
              $region108: #{lightgcn_forward.12} parent=103 // loop_body
                %v440 = vld [vmem:[%s438] sm:$0xff]
                %441 = vst [vmem:[%s439] sm:$0xff] %v440
                %v442 = vld [vmem:[%s438 + $0x8] sm:$0xff]
                %443 = vst [vmem:[%s439 + $0x8] sm:$0xff] %v442
                %v444 = vld [vmem:[%s438 + $0x20] sm:$0xff]
                %445 = vst [vmem:[%s439 + $0x10] sm:$0xff] %v444
                %v446 = vld [vmem:[%s438 + $0x28] sm:$0xff]
                %447 = vst [vmem:[%s439 + $0x18] sm:$0xff] %v446
                %v448 = vld [vmem:[%s438 + $0x40] sm:$0xff]
                %449 = vst [vmem:[%s439 + $0x20] sm:$0xff] %v448
                %v450 = vld [vmem:[%s438 + $0x48] sm:$0xff]
                %451 = vst [vmem:[%s439 + $0x28] sm:$0xff] %v450
                %v452 = vld [vmem:[%s438 + $0x60] sm:$0xff]
                %453 = vst [vmem:[%s439 + $0x30] sm:$0xff] %v452
                %v454 = vld [vmem:[%s438 + $0x68] sm:$0xff]
                %455 = vst [vmem:[%s439 + $0x38] sm:$0xff] %v454
                %v456 = vld [vmem:[%s438 + $0x80] sm:$0xff]
                %457 = vst [vmem:[%s439 + $0x40] sm:$0xff] %v456
                %v458 = vld [vmem:[%s438 + $0x88] sm:$0xff]
                %459 = vst [vmem:[%s439 + $0x48] sm:$0xff] %v458
                %v460 = vld [vmem:[%s438 + $0xa0] sm:$0xff]
                %461 = vst [vmem:[%s439 + $0x50] sm:$0xff] %v460
                %v462 = vld [vmem:[%s438 + $0xa8] sm:$0xff]
                %463 = vst [vmem:[%s439 + $0x58] sm:$0xff] %v462
                %v464 = vld [vmem:[%s438 + $0xc0] sm:$0xff]
                %465 = vst [vmem:[%s439 + $0x60] sm:$0xff] %v464
                %v466 = vld [vmem:[%s438 + $0xc8] sm:$0xff]
                %467 = vst [vmem:[%s439 + $0x68] sm:$0xff] %v466
                %v468 = vld [vmem:[%s438 + $0xe0] sm:$0xff]
                %469 = vst [vmem:[%s439 + $0x70] sm:$0xff] %v468
                %v470 = vld [vmem:[%s438 + $0xe8] sm:$0xff]
                %471 = vst [vmem:[%s439 + $0x78] sm:$0xff] %v470
              $region109: #{lightgcn_forward.12} parent=103 // loop_footer
                %s437 = sadd.s32 1, %s433
              $region110: #{lightgcn_forward.12} parent=103 // loop_footer_branch
                %432 = sbr.rel target = $region106
              $region111: #{lightgcn_forward.12} parent=103 // loop_exit
                _
            $region104: #{lightgcn_forward.12} parent=99 // pred_fallthru
              _
            // Predicated region
            $region112: #{lightgcn_forward.12} parent=99 // pred_check
              _
            $region113: #{lightgcn_forward.12} parent=99 // pred_check_branch
              %473 = sbr.rel target = $region115
            $region114: #{lightgcn_forward.12} parent=99 // pred_region
              _
            $region115: #{lightgcn_forward.12} parent=99 // pred_fallthru
              _
          $region100: #{lightgcn_forward.12} parent=95 // pred_fallthru
            _
          %474 = vnop
        $region96: #{lightgcn_forward.12} parent=15 // pred_fallthru
          _
      $region16: #{lightgcn_forward.12} parent=5 // pred_fallthru
        _
      %p475 = scmp.le.s32.totalorder 1, %s14
      %p476 = scmp.lt.s32.totalorder %s14, 5
      %p477 = pnand %p475, %p476
      %p478 = pneg %p477
      // Predicated region
      $region116: #{lightgcn_forward.12} parent=5 // pred_check
        _
      $region117: #{lightgcn_forward.12} parent=5 // pred_check_branch
        %480 = sbr.rel (%p477) target = $region119
      $region118: #{lightgcn_forward.12} parent=5 // pred_region
        %s481 = ssub.s32 %s14, 1
        %s482 = sand.u32 %s39, 1
        %s483 = sand.u32 %s39, 1
        %s484 = smul.addr %s483, 64
        %s485 = scalar_lea.vmem [#allocation3], %s484
        // Predicated region
        $region120: #{lightgcn_forward.12} parent=118 // pred_check
          %p486 = pneg %p52
        $region121: #{lightgcn_forward.12} parent=118 // pred_check_branch
          %488 = sbr.rel (%p486) target = $region123
        $region122: #{lightgcn_forward.12} parent=118 // pred_region
          _
        $region123: #{lightgcn_forward.12} parent=118 // pred_fallthru
          _
        %s489 = sand.u32 %s67, 1
        %s490 = sand.u32 %s67, 1
        %s491 = smul.addr %s490, 256
        %s492 = scalar_lea.vmem [#allocation4], %s491
        // Predicated region
        $region124: #{lightgcn_forward.12} parent=118 // pred_check
          %p493 = pneg %p80
        $region125: #{lightgcn_forward.12} parent=118 // pred_check_branch
          %495 = sbr.rel (%p493) target = $region127
        $region126: #{lightgcn_forward.12} parent=118 // pred_region
          _
        $region127: #{lightgcn_forward.12} parent=118 // pred_fallthru
          _
        %s496 = sand.u32 %s93, 1
        %s497 = sand.u32 %s93, 1
        %s498 = smul.addr %s497, 128
        %s499 = scalar_lea.vmem [#allocation5], %s498
        // Predicated region
        $region128: #{lightgcn_forward.12} parent=118 // pred_check
          %p500 = pneg %p106
        $region129: #{lightgcn_forward.12} parent=118 // pred_check_branch
          %502 = sbr.rel (%p500) target = $region131
        $region130: #{lightgcn_forward.12} parent=118 // pred_region
          _
        $region131: #{lightgcn_forward.12} parent=118 // pred_fallthru
          _
        %s503 = sand.u32 %s39, 1
        %s504 = sand.u32 %s39, 1
        %s505 = smul.addr %s504, 64
        %s506 = scalar_lea.vmem [#allocation3], %s505
        %p507 = pneg %p52
        %p508 = pneg %p49
        %s509 = sand.u32 %s67, 1
        %s510 = sand.u32 %s67, 1
        %s511 = smul.addr %s510, 256
        %s512 = scalar_lea.vmem [#allocation4], %s511
        %p513 = pneg %p80
        %p514 = pneg %p77
        %s515 = sand.u32 %s93, 1
        %s516 = sand.u32 %s93, 1
        %s517 = smul.addr %s516, 128
        %s518 = scalar_lea.vmem [#allocation5], %s517
        %p519 = pneg %p106
        %p520 = pneg %p103
        %p521 = pneg %p132
        %p522 = pneg %p129
        %s523 = sand.u32 %s119, 1
        %s524 = scalar_lea.sflag [#allocation7], %s523
        %s525 = sand.u32 %s119, 1
        %s526 = smul.addr %s525, 64
        %s527 = scalar_lea.vmem [#allocation6], %s526
        %p528 = pneg %p158
        %p529 = pneg %p155
        %s530 = sand.u32 %s145, 1
        %s531 = sand.u32 %s145, 1
        %s532 = smul.addr %s531, 128
        %s533 = scalar_lea.vmem [#allocation8], %s532
        %s534 = smul.u32 2, %s24
        %s535 = smul.u32 32, %s24
        %s536 = smul.u32 2, %s23
        %s537 = smul.u32 2, %s23
        %s538 = smul.u32 2, %s23
        %s539 = smul.u32 2, %s23
        %p540 = scmp.eq.s32.totalorder %s24, 0
        // Predicated region
        $region132: #{lightgcn_forward.12} parent=118 // pred_check
          %p541 = pneg %p540
        $region133: #{lightgcn_forward.12} parent=118 // pred_check_branch
          %543 = sbr.rel (%p541) target = $region135
        $region134: #{lightgcn_forward.12} parent=118 // pred_region
          %544 = vst [vmem:[#allocation2] sm:$0xff] 0.0
          %545 = vst [vmem:[#allocation2 + $0x8] sm:$0xff] 0.0
          %546 = vst [vmem:[#allocation2 + $0x10] sm:$0xff] 0.0
          %547 = vst [vmem:[#allocation2 + $0x18] sm:$0xff] 0.0
          %548 = vst [vmem:[#allocation2 + $0x20] sm:$0xff] 0.0
          %549 = vst [vmem:[#allocation2 + $0x28] sm:$0xff] 0.0
          %550 = vst [vmem:[#allocation2 + $0x30] sm:$0xff] 0.0
          %551 = vst [vmem:[#allocation2 + $0x38] sm:$0xff] 0.0
          %552 = vst [vmem:[#allocation2 + $0x40] sm:$0xff] 0.0
          %553 = vst [vmem:[#allocation2 + $0x48] sm:$0xff] 0.0
          %554 = vst [vmem:[#allocation2 + $0x50] sm:$0xff] 0.0
          %555 = vst [vmem:[#allocation2 + $0x58] sm:$0xff] 0.0
          %556 = vst [vmem:[#allocation2 + $0x60] sm:$0xff] 0.0
          %557 = vst [vmem:[#allocation2 + $0x68] sm:$0xff] 0.0
          %558 = vst [vmem:[#allocation2 + $0x70] sm:$0xff] 0.0
          %559 = vst [vmem:[#allocation2 + $0x78] sm:$0xff] 0.0
        $region135: #{lightgcn_forward.12} parent=118 // pred_fallthru
          _
        %v560 = vld [vmem:[#allocation2] sm:$0xff]
        %v561 = vld [vmem:[#allocation2 + $0x8] sm:$0xff]
        %v562 = vld [vmem:[#allocation2 + $0x10] sm:$0xff]
        %v563 = vld [vmem:[#allocation2 + $0x18] sm:$0xff]
        %v564 = vld [vmem:[#allocation2 + $0x20] sm:$0xff]
        %v565 = vld [vmem:[#allocation2 + $0x28] sm:$0xff]
        %v566 = vld [vmem:[#allocation2 + $0x30] sm:$0xff]
        %v567 = vld [vmem:[#allocation2 + $0x38] sm:$0xff]
        %v568 = vld [vmem:[#allocation2 + $0x40] sm:$0xff]
        %v569 = vld [vmem:[#allocation2 + $0x48] sm:$0xff]
        %v570 = vld [vmem:[#allocation2 + $0x50] sm:$0xff]
        %v571 = vld [vmem:[#allocation2 + $0x58] sm:$0xff]
        %v572 = vld [vmem:[#allocation2 + $0x60] sm:$0xff]
        %v573 = vld [vmem:[#allocation2 + $0x68] sm:$0xff]
        %v574 = vld [vmem:[#allocation2 + $0x70] sm:$0xff]
        %v575 = vld [vmem:[#allocation2 + $0x78] sm:$0xff]
        %v576 = vld [vmem:[%s485] sm:$0xff]
        %v577 = vld [vmem:[%s485 + $0x8] sm:$0xff]
        %v578 = vld [vmem:[%s485 + $0x10] sm:$0xff]
        %v579 = vld [vmem:[%s485 + $0x18] sm:$0xff]
        %v580 = vld [vmem:[%s485 + $0x20] sm:$0xff]
        %v581 = vld [vmem:[%s485 + $0x28] sm:$0xff]
        %v582 = vld [vmem:[%s485 + $0x30] sm:$0xff]
        %v583 = vld [vmem:[%s485 + $0x38] sm:$0xff]
        %v584 = vld [vmem:[%s492] sm:$0xff]
        %v585 = vld [vmem:[%s492 + $0x8] sm:$0xff]
        %v586 = vld [vmem:[%s492 + $0x10] sm:$0xff]
        %v587 = vld [vmem:[%s492 + $0x18] sm:$0xff]
        %v588 = vld [vmem:[%s492 + $0x20] sm:$0xff]
        %v589 = vld [vmem:[%s492 + $0x28] sm:$0xff]
        %v590 = vld [vmem:[%s492 + $0x30] sm:$0xff]
        %v591 = vld [vmem:[%s492 + $0x38] sm:$0xff]
        %v592 = vld [vmem:[%s492 + $0x40] sm:$0xff]
        %v593 = vld [vmem:[%s492 + $0x48] sm:$0xff]
        %v594 = vld [vmem:[%s492 + $0x50] sm:$0xff]
        %v595 = vld [vmem:[%s492 + $0x58] sm:$0xff]
        %v596 = vld [vmem:[%s492 + $0x60] sm:$0xff]
        %v597 = vld [vmem:[%s492 + $0x68] sm:$0xff]
        %v598 = vld [vmem:[%s492 + $0x70] sm:$0xff]
        %v599 = vld [vmem:[%s492 + $0x78] sm:$0xff]
        %v600 = vld [vmem:[%s492 + $0x80] sm:$0xff]
        %v601 = vld [vmem:[%s492 + $0x88] sm:$0xff]
        %v602 = vld [vmem:[%s492 + $0x90] sm:$0xff]
        %v603 = vld [vmem:[%s492 + $0x98] sm:$0xff]
        %v604 = vld [vmem:[%s492 + $0xa0] sm:$0xff]
        %v605 = vld [vmem:[%s492 + $0xa8] sm:$0xff]
        %v606 = vld [vmem:[%s492 + $0xb0] sm:$0xff]
        %v607 = vld [vmem:[%s492 + $0xb8] sm:$0xff]
        %v608 = vld [vmem:[%s492 + $0xc0] sm:$0xff]
        %v609 = vld [vmem:[%s492 + $0xc8] sm:$0xff]
        %v610 = vld [vmem:[%s492 + $0xd0] sm:$0xff]
        %v611 = vld [vmem:[%s492 + $0xd8] sm:$0xff]
        %v612 = vld [vmem:[%s492 + $0xe0] sm:$0xff]
        %v613 = vld [vmem:[%s492 + $0xe8] sm:$0xff]
        %v614 = vld [vmem:[%s492 + $0xf0] sm:$0xff]
        %v615 = vld [vmem:[%s492 + $0xf8] sm:$0xff]
        %v624 = vunpack.c.l.b16 %v576
        %v625 = vunpack.c.h.b16 %v576
        %v626 = vunpack.c.l.b16 %v577
        %v627 = vunpack.c.h.b16 %v577
        %v628 = vunpack.c.l.b16 %v578
        %v629 = vunpack.c.h.b16 %v578
        %v630 = vunpack.c.l.b16 %v579
        %v631 = vunpack.c.h.b16 %v579
        %v632 = vunpack.c.l.b16 %v580
        %v633 = vunpack.c.h.b16 %v580
        %v634 = vunpack.c.l.b16 %v581
        %v635 = vunpack.c.h.b16 %v581
        %v636 = vunpack.c.l.b16 %v582
        %v637 = vunpack.c.h.b16 %v582
        %v638 = vunpack.c.l.b16 %v583
        %v639 = vunpack.c.h.b16 %v583
        %v640 = vpack.c.b16 %v626, %v624
        %v641 = vpack.c.b16 %v627, %v625
        %v642 = vpack.c.b16 %v630, %v628
        %v643 = vpack.c.b16 %v631, %v629
        %v644 = vpack.c.b16 %v634, %v632
        %v645 = vpack.c.b16 %v635, %v633
        %v646 = vpack.c.b16 %v638, %v636
        %v647 = vpack.c.b16 %v639, %v637
        %v688 = vunpack.c.l.b16 %v584
        %v689 = vunpack.c.h.b16 %v584
        %v690 = vunpack.c.l.b16 %v585
        %v691 = vunpack.c.h.b16 %v585
        %v692 = vunpack.c.l.b16 %v586
        %v693 = vunpack.c.h.b16 %v586
        %v694 = vunpack.c.l.b16 %v587
        %v695 = vunpack.c.h.b16 %v587
        %v696 = vunpack.c.l.b16 %v588
        %v697 = vunpack.c.h.b16 %v588
        %v698 = vunpack.c.l.b16 %v589
        %v699 = vunpack.c.h.b16 %v589
        %v700 = vunpack.c.l.b16 %v590
        %v701 = vunpack.c.h.b16 %v590
        %v702 = vunpack.c.l.b16 %v591
        %v703 = vunpack.c.h.b16 %v591
        %v704 = vunpack.c.l.b16 %v592
        %v705 = vunpack.c.h.b16 %v592
        %v706 = vunpack.c.l.b16 %v593
        %v707 = vunpack.c.h.b16 %v593
        %v708 = vunpack.c.l.b16 %v594
        %v709 = vunpack.c.h.b16 %v594
        %v710 = vunpack.c.l.b16 %v595
        %v711 = vunpack.c.h.b16 %v595
        %v712 = vunpack.c.l.b16 %v596
        %v713 = vunpack.c.h.b16 %v596
        %v714 = vunpack.c.l.b16 %v597
        %v715 = vunpack.c.h.b16 %v597
        %v716 = vunpack.c.l.b16 %v598
        %v717 = vunpack.c.h.b16 %v598
        %v718 = vunpack.c.l.b16 %v599
        %v719 = vunpack.c.h.b16 %v599
        %v720 = vunpack.c.l.b16 %v600
        %v721 = vunpack.c.h.b16 %v600
        %v722 = vunpack.c.l.b16 %v601
        %v723 = vunpack.c.h.b16 %v601
        %v724 = vunpack.c.l.b16 %v602
        %v725 = vunpack.c.h.b16 %v602
        %v726 = vunpack.c.l.b16 %v603
        %v727 = vunpack.c.h.b16 %v603
        %v728 = vunpack.c.l.b16 %v604
        %v729 = vunpack.c.h.b16 %v604
        %v730 = vunpack.c.l.b16 %v605
        %v731 = vunpack.c.h.b16 %v605
        %v732 = vunpack.c.l.b16 %v606
        %v733 = vunpack.c.h.b16 %v606
        %v734 = vunpack.c.l.b16 %v607
        %v735 = vunpack.c.h.b16 %v607
        %v736 = vunpack.c.l.b16 %v608
        %v737 = vunpack.c.h.b16 %v608
        %v738 = vunpack.c.l.b16 %v609
        %v739 = vunpack.c.h.b16 %v609
        %v740 = vunpack.c.l.b16 %v610
        %v741 = vunpack.c.h.b16 %v610
        %v742 = vunpack.c.l.b16 %v611
        %v743 = vunpack.c.h.b16 %v611
        %v744 = vunpack.c.l.b16 %v612
        %v745 = vunpack.c.h.b16 %v612
        %v746 = vunpack.c.l.b16 %v613
        %v747 = vunpack.c.h.b16 %v613
        %v748 = vunpack.c.l.b16 %v614
        %v749 = vunpack.c.h.b16 %v614
        %v750 = vunpack.c.l.b16 %v615
        %v751 = vunpack.c.h.b16 %v615
        %v752 = vpack.c.b16 %v690, %v688
        %v753 = vpack.c.b16 %v691, %v689
        %v754 = vpack.c.b16 %v694, %v692
        %v755 = vpack.c.b16 %v695, %v693
        %v756 = vpack.c.b16 %v698, %v696
        %v757 = vpack.c.b16 %v699, %v697
        %v758 = vpack.c.b16 %v702, %v700
        %v759 = vpack.c.b16 %v703, %v701
        %v760 = vpack.c.b16 %v706, %v704
        %v761 = vpack.c.b16 %v707, %v705
        %v762 = vpack.c.b16 %v710, %v708
        %v763 = vpack.c.b16 %v711, %v709
        %v764 = vpack.c.b16 %v714, %v712
        %v765 = vpack.c.b16 %v715, %v713
        %v766 = vpack.c.b16 %v718, %v716
        %v767 = vpack.c.b16 %v719, %v717
        %v768 = vpack.c.b16 %v722, %v720
        %v769 = vpack.c.b16 %v723, %v721
        %v770 = vpack.c.b16 %v726, %v724
        %v771 = vpack.c.b16 %v727, %v725
        %v772 = vpack.c.b16 %v730, %v728
        %v773 = vpack.c.b16 %v731, %v729
        %v774 = vpack.c.b16 %v734, %v732
        %v775 = vpack.c.b16 %v735, %v733
        %v776 = vpack.c.b16 %v738, %v736
        %v777 = vpack.c.b16 %v739, %v737
        %v778 = vpack.c.b16 %v742, %v740
        %v779 = vpack.c.b16 %v743, %v741
        %v780 = vpack.c.b16 %v746, %v744
        %v781 = vpack.c.b16 %v747, %v745
        %v782 = vpack.c.b16 %v750, %v748
        %v783 = vpack.c.b16 %v751, %v749
        %816 = vmatpush.bf16.msra.mxu0 %v766
        %817 = vmatpush.bf16.msra.mxu0 %v764
        %818 = vmatpush.bf16.msra.mxu0 %v762
        %819 = vmatpush.bf16.msra.mxu0 %v760
        %820 = vmatpush.bf16.msra.mxu0 %v758
        %821 = vmatpush.bf16.msra.mxu0 %v756
        %822 = vmatpush.bf16.msra.mxu0 %v754
        %823 = vmatpush.bf16.msra.mxu0 %v752
        %824 = vmatmul.bf16.gmra.mxu0 %v640
        %v825 = vpop.f32.mrf.mxu0
        %v826 = vadd.f32 0.0, %v825
        %v827 = vpop.f32.mrf.mxu0
        %v828 = vadd.f32 0.0, %v827
        %829 = vmatmul.bf16.gmra.mxu0 %v642
        %v830 = vpop.f32.mrf.mxu0
        %v831 = vadd.f32 0.0, %v830
        %v832 = vpop.f32.mrf.mxu0
        %v833 = vadd.f32 0.0, %v832
        %834 = vmatmul.bf16.gmra.mxu0 %v644
        %v835 = vpop.f32.mrf.mxu0
        %v836 = vadd.f32 0.0, %v835
        %v837 = vpop.f32.mrf.mxu0
        %v838 = vadd.f32 0.0, %v837
        %839 = vmatmul.bf16.gmra.mxu0 %v646
        %v840 = vpop.f32.mrf.mxu0
        %v841 = vadd.f32 0.0, %v840
        %v842 = vpop.f32.mrf.mxu0
        %v843 = vadd.f32 0.0, %v842
        %844 = vdwg.mxu0
        %845 = vmatpush.bf16.msra.mxu0 %v782
        %846 = vmatpush.bf16.msra.mxu0 %v780
        %847 = vmatpush.bf16.msra.mxu0 %v778
        %848 = vmatpush.bf16.msra.mxu0 %v776
        %849 = vmatpush.bf16.msra.mxu0 %v774
        %850 = vmatpush.bf16.msra.mxu0 %v772
        %851 = vmatpush.bf16.msra.mxu0 %v770
        %852 = vmatpush.bf16.msra.mxu0 %v768
        %853 = vmatmul.bf16.gmra.mxu0 %v641
        %v854 = vpop.f32.mrf.mxu0
        %v855 = vadd.f32 %v826, %v854
        %v856 = vpop.f32.mrf.mxu0
        %v857 = vadd.f32 %v828, %v856
        %858 = vmatmul.bf16.gmra.mxu0 %v643
        %v859 = vpop.f32.mrf.mxu0
        %v860 = vadd.f32 %v831, %v859
        %v861 = vpop.f32.mrf.mxu0
        %v862 = vadd.f32 %v833, %v861
        %863 = vmatmul.bf16.gmra.mxu0 %v645
        %v864 = vpop.f32.mrf.mxu0
        %v865 = vadd.f32 %v836, %v864
        %v866 = vpop.f32.mrf.mxu0
        %v867 = vadd.f32 %v838, %v866
        %868 = vmatmul.bf16.gmra.mxu0 %v647
        %v869 = vpop.f32.mrf.mxu0
        %v870 = vadd.f32 %v841, %v869
        %v871 = vpop.f32.mrf.mxu0
        %v872 = vadd.f32 %v843, %v871
        %873 = vdwg.mxu0
        %874 = vmatpush.bf16.msra.mxu0 %v767
        %875 = vmatpush.bf16.msra.mxu0 %v765
        %876 = vmatpush.bf16.msra.mxu0 %v763
        %877 = vmatpush.bf16.msra.mxu0 %v761
        %878 = vmatpush.bf16.msra.mxu0 %v759
        %879 = vmatpush.bf16.msra.mxu0 %v757
        %880 = vmatpush.bf16.msra.mxu0 %v755
        %881 = vmatpush.bf16.msra.mxu0 %v753
        %882 = vmatmul.bf16.gmra.mxu0 %v640
        %v883 = vpop.f32.mrf.mxu0
        %v884 = vadd.f32 0.0, %v883
        %v885 = vpop.f32.mrf.mxu0
        %v886 = vadd.f32 0.0, %v885
        %887 = vmatmul.bf16.gmra.mxu0 %v642
        %v888 = vpop.f32.mrf.mxu0
        %v889 = vadd.f32 0.0, %v888
        %v890 = vpop.f32.mrf.mxu0
        %v891 = vadd.f32 0.0, %v890
        %892 = vmatmul.bf16.gmra.mxu0 %v644
        %v893 = vpop.f32.mrf.mxu0
        %v894 = vadd.f32 0.0, %v893
        %v895 = vpop.f32.mrf.mxu0
        %v896 = vadd.f32 0.0, %v895
        %897 = vmatmul.bf16.gmra.mxu0 %v646
        %v898 = vpop.f32.mrf.mxu0
        %v899 = vadd.f32 0.0, %v898
        %v900 = vpop.f32.mrf.mxu0
        %v901 = vadd.f32 0.0, %v900
        %902 = vdwg.mxu0
        %903 = vmatpush.bf16.msra.mxu0 %v783
        %904 = vmatpush.bf16.msra.mxu0 %v781
        %905 = vmatpush.bf16.msra.mxu0 %v779
        %906 = vmatpush.bf16.msra.mxu0 %v777
        %907 = vmatpush.bf16.msra.mxu0 %v775
        %908 = vmatpush.bf16.msra.mxu0 %v773
        %909 = vmatpush.bf16.msra.mxu0 %v771
        %910 = vmatpush.bf16.msra.mxu0 %v769
        %911 = vmatmul.bf16.gmra.mxu0 %v641
        %v912 = vpop.f32.mrf.mxu0
        %v913 = vadd.f32 %v884, %v912
        %v914 = vpop.f32.mrf.mxu0
        %v915 = vadd.f32 %v886, %v914
        %916 = vmatmul.bf16.gmra.mxu0 %v643
        %v917 = vpop.f32.mrf.mxu0
        %v918 = vadd.f32 %v889, %v917
        %v919 = vpop.f32.mrf.mxu0
        %v920 = vadd.f32 %v891, %v919
        %921 = vmatmul.bf16.gmra.mxu0 %v645
        %v922 = vpop.f32.mrf.mxu0
        %v923 = vadd.f32 %v894, %v922
        %v924 = vpop.f32.mrf.mxu0
        %v925 = vadd.f32 %v896, %v924
        %926 = vmatmul.bf16.gmra.mxu0 %v647
        %v927 = vpop.f32.mrf.mxu0
        %v928 = vadd.f32 %v899, %v927
        %v929 = vpop.f32.mrf.mxu0
        %v930 = vadd.f32 %v901, %v929
        %931 = vdwg.mxu0
        %v932 = vadd.f32 %v560, %v855
        %v933 = vadd.f32 %v561, %v913
        %v934 = vadd.f32 %v562, %v857
        %v935 = vadd.f32 %v563, %v915
        %v936 = vadd.f32 %v564, %v860
        %v937 = vadd.f32 %v565, %v918
        %v938 = vadd.f32 %v566, %v862
        %v939 = vadd.f32 %v567, %v920
        %v940 = vadd.f32 %v568, %v865
        %v941 = vadd.f32 %v569, %v923
        %v942 = vadd.f32 %v570, %v867
        %v943 = vadd.f32 %v571, %v925
        %v944 = vadd.f32 %v572, %v870
        %v945 = vadd.f32 %v573, %v928
        %v946 = vadd.f32 %v574, %v872
        %v947 = vadd.f32 %v575, %v930
        %948 = vst [vmem:[#allocation2] sm:$0xff] %v932
        %949 = vst [vmem:[#allocation2 + $0x8] sm:$0xff] %v933
        %950 = vst [vmem:[#allocation2 + $0x10] sm:$0xff] %v934
        %951 = vst [vmem:[#allocation2 + $0x18] sm:$0xff] %v935
        %952 = vst [vmem:[#allocation2 + $0x20] sm:$0xff] %v936
        %953 = vst [vmem:[#allocation2 + $0x28] sm:$0xff] %v937
        %954 = vst [vmem:[#allocation2 + $0x30] sm:$0xff] %v938
        %955 = vst [vmem:[#allocation2 + $0x38] sm:$0xff] %v939
        %956 = vst [vmem:[#allocation2 + $0x40] sm:$0xff] %v940
        %957 = vst [vmem:[#allocation2 + $0x48] sm:$0xff] %v941
        %958 = vst [vmem:[#allocation2 + $0x50] sm:$0xff] %v942
        %959 = vst [vmem:[#allocation2 + $0x58] sm:$0xff] %v943
        %960 = vst [vmem:[#allocation2 + $0x60] sm:$0xff] %v944
        %961 = vst [vmem:[#allocation2 + $0x68] sm:$0xff] %v945
        %962 = vst [vmem:[#allocation2 + $0x70] sm:$0xff] %v946
        %963 = vst [vmem:[#allocation2 + $0x78] sm:$0xff] %v947
        %p964 = scmp.eq.s32.totalorder %s24, 1
        // Predicated region
        $region136: #{lightgcn_forward.12} parent=118 // pred_check
          %p965 = pneg %p964
        $region137: #{lightgcn_forward.12} parent=118 // pred_check_branch
          %967 = sbr.rel (%p965) target = $region139
        $region138: #{lightgcn_forward.12} parent=118 // pred_region
          %v968 = vld [vmem:[#allocation2] sm:$0xff]
          %v969 = vld [vmem:[#allocation2 + $0x8] sm:$0xff]
          %v970 = vld [vmem:[#allocation2 + $0x10] sm:$0xff]
          %v971 = vld [vmem:[#allocation2 + $0x18] sm:$0xff]
          %v972 = vld [vmem:[#allocation2 + $0x20] sm:$0xff]
          %v973 = vld [vmem:[#allocation2 + $0x28] sm:$0xff]
          %v974 = vld [vmem:[#allocation2 + $0x30] sm:$0xff]
          %v975 = vld [vmem:[#allocation2 + $0x38] sm:$0xff]
          %v976 = vld [vmem:[#allocation2 + $0x40] sm:$0xff]
          %v977 = vld [vmem:[#allocation2 + $0x48] sm:$0xff]
          %v978 = vld [vmem:[#allocation2 + $0x50] sm:$0xff]
          %v979 = vld [vmem:[#allocation2 + $0x58] sm:$0xff]
          %v980 = vld [vmem:[#allocation2 + $0x60] sm:$0xff]
          %v981 = vld [vmem:[#allocation2 + $0x68] sm:$0xff]
          %v982 = vld [vmem:[#allocation2 + $0x70] sm:$0xff]
          %v983 = vld [vmem:[#allocation2 + $0x78] sm:$0xff]
          %v984 = vpack.c.bf16 %v969, %v968
          %v985 = vpack.c.bf16 %v971, %v970
          %v986 = vpack.c.bf16 %v973, %v972
          %v987 = vpack.c.bf16 %v975, %v974
          %v988 = vpack.c.bf16 %v977, %v976
          %v989 = vpack.c.bf16 %v979, %v978
          %v990 = vpack.c.bf16 %v981, %v980
          %v991 = vpack.c.bf16 %v983, %v982
          %992 = vst [vmem:[%s527] sm:$0xff] %v984
          %993 = vst [vmem:[%s527 + $0x8] sm:$0xff] %v985
          %994 = vst [vmem:[%s527 + $0x10] sm:$0xff] %v986
          %995 = vst [vmem:[%s527 + $0x18] sm:$0xff] %v987
          %996 = vst [vmem:[%s527 + $0x20] sm:$0xff] %v988
          %997 = vst [vmem:[%s527 + $0x28] sm:$0xff] %v989
          %998 = vst [vmem:[%s527 + $0x30] sm:$0xff] %v990
          %999 = vst [vmem:[%s527 + $0x38] sm:$0xff] %v991
          %v1000 = vld [vmem:[%s499] sm:$0xff]
          %v1001 = vld [vmem:[%s499 + $0x8] sm:$0xff]
          %v1002 = vld [vmem:[%s499 + $0x10] sm:$0xff]
          %v1003 = vld [vmem:[%s499 + $0x18] sm:$0xff]
          %v1004 = vld [vmem:[%s499 + $0x20] sm:$0xff]
          %v1005 = vld [vmem:[%s499 + $0x28] sm:$0xff]
          %v1006 = vld [vmem:[%s499 + $0x30] sm:$0xff]
          %v1007 = vld [vmem:[%s499 + $0x38] sm:$0xff]
          %v1008 = vld [vmem:[%s499 + $0x40] sm:$0xff]
          %v1009 = vld [vmem:[%s499 + $0x48] sm:$0xff]
          %v1010 = vld [vmem:[%s499 + $0x50] sm:$0xff]
          %v1011 = vld [vmem:[%s499 + $0x58] sm:$0xff]
          %v1012 = vld [vmem:[%s499 + $0x60] sm:$0xff]
          %v1013 = vld [vmem:[%s499 + $0x68] sm:$0xff]
          %v1014 = vld [vmem:[%s499 + $0x70] sm:$0xff]
          %v1015 = vld [vmem:[%s499 + $0x78] sm:$0xff]
          %v1016 = vadd.f32 %v1000, %v968
          %v1017 = vadd.f32 %v1001, %v969
          %v1018 = vadd.f32 %v1002, %v970
          %v1019 = vadd.f32 %v1003, %v971
          %v1020 = vadd.f32 %v1004, %v972
          %v1021 = vadd.f32 %v1005, %v973
          %v1022 = vadd.f32 %v1006, %v974
          %v1023 = vadd.f32 %v1007, %v975
          %v1024 = vadd.f32 %v1008, %v976
          %v1025 = vadd.f32 %v1009, %v977
          %v1026 = vadd.f32 %v1010, %v978
          %v1027 = vadd.f32 %v1011, %v979
          %v1028 = vadd.f32 %v1012, %v980
          %v1029 = vadd.f32 %v1013, %v981
          %v1030 = vadd.f32 %v1014, %v982
          %v1031 = vadd.f32 %v1015, %v983
          %1032 = vst [vmem:[%s533] sm:$0xff] %v1016
          %1033 = vst [vmem:[%s533 + $0x8] sm:$0xff] %v1017
          %1034 = vst [vmem:[%s533 + $0x10] sm:$0xff] %v1018
          %1035 = vst [vmem:[%s533 + $0x18] sm:$0xff] %v1019
          %1036 = vst [vmem:[%s533 + $0x20] sm:$0xff] %v1020
          %1037 = vst [vmem:[%s533 + $0x28] sm:$0xff] %v1021
          %1038 = vst [vmem:[%s533 + $0x30] sm:$0xff] %v1022
          %1039 = vst [vmem:[%s533 + $0x38] sm:$0xff] %v1023
          %1040 = vst [vmem:[%s533 + $0x40] sm:$0xff] %v1024
          %1041 = vst [vmem:[%s533 + $0x48] sm:$0xff] %v1025
          %1042 = vst [vmem:[%s533 + $0x50] sm:$0xff] %v1026
          %1043 = vst [vmem:[%s533 + $0x58] sm:$0xff] %v1027
          %1044 = vst [vmem:[%s533 + $0x60] sm:$0xff] %v1028
          %1045 = vst [vmem:[%s533 + $0x68] sm:$0xff] %v1029
          %1046 = vst [vmem:[%s533 + $0x70] sm:$0xff] %v1030
          %1047 = vst [vmem:[%s533 + $0x78] sm:$0xff] %v1031
        $region139: #{lightgcn_forward.12} parent=118 // pred_fallthru
          _
        %s1048 = sand.u32 %s119, 1
        %s1049 = scalar_lea.sflag [#allocation7], %s1048
        %s1050 = sand.u32 %s119, 1
        %s1051 = smul.addr %s1050, 64
        %s1052 = scalar_lea.vmem [#allocation6], %s1051
        %s1053 = sand.u32 %s145, 1
        %s1054 = sand.u32 %s145, 1
        %s1055 = smul.addr %s1054, 128
        %s1056 = scalar_lea.vmem [#allocation8], %s1055
        // Predicated region
        $region140: #{lightgcn_forward.12} parent=118 // pred_check
          %p1057 = pneg %p129
        $region141: #{lightgcn_forward.12} parent=118 // pred_check_branch
          %1059 = sbr.rel (%p1057) target = $region143
        $region142: #{lightgcn_forward.12} parent=118 // pred_region
          %s1060 = smul.u32 2, %s23
          %1062 = vsyncadd %s1049, 0
          %s1063 = smul.addr %s1060, 4
          %s1064 = scalar_lea.hbm %s3, %s1063
          %s1065 = sshll.u32 %s1052, 4
          %s1066 = int_to_ptr.vmem [resolvable:$true] %s1065
          %s1067 = sshll.u32 %s1064, 4
          %s1068 = int_to_ptr.hbm [resolvable:$true] %s1067
          %1073 = dma.vmem_to_hbm [thread:$0]  %s1066, 1024, %s1068, %s1049, 128, 256, 8
        $region143: #{lightgcn_forward.12} parent=118 // pred_fallthru
          _
        // Predicated region
        $region144: #{lightgcn_forward.12} parent=118 // pred_check
          %p1074 = pneg %p155
        $region145: #{lightgcn_forward.12} parent=118 // pred_check_branch
          %1076 = sbr.rel (%p1074) target = $region147
        $region146: #{lightgcn_forward.12} parent=118 // pred_region
          %s1077 = smul.u32 2, %s23
          %s1078 = smul.addr %s1077, 8
          %s1079 = scalar_lea.vmem %s4, %s1078
          // Predicated region
          $region148: #{lightgcn_forward.12} parent=146 // pred_check
            _
          $region149: #{lightgcn_forward.12} parent=146 // pred_check_branch
            %1081 = sbr.rel (0) target = $region151
          $region150: #{lightgcn_forward.12} parent=146 // pred_region
            // Predicated region
            $region152: #{lightgcn_forward.12} parent=150 // pred_check
              _
            $region153: #{lightgcn_forward.12} parent=150 // pred_check_branch
              %1083 = sbr.rel (0) target = $region155
            $region154: #{lightgcn_forward.12} parent=150 // pred_region
              loop: start=0, step=1, limit=1
              $region156: #{lightgcn_forward.12} parent=154 // loop_pre_header
                _
              $region157: #{lightgcn_forward.12} parent=154 // loop_header
                %s1085 = sphi 0, %s1089
                %p1086 = scmp.ge.s32.totalorder %s1085, 1
                %s1090 = sphi %s1056, %s1056
                %s1091 = sphi %s1079, %s1079
              $region158: #{lightgcn_forward.12} parent=154 // loop_header_branch
                %1088 = sbr.rel (%p1086) target = $region162
              $region159: #{lightgcn_forward.12} parent=154 // loop_body
                %v1092 = vld [vmem:[%s1090] sm:$0xff]
                %1093 = vst [vmem:[%s1091] sm:$0xff] %v1092
                %v1094 = vld [vmem:[%s1090 + $0x8] sm:$0xff]
                %1095 = vst [vmem:[%s1091 + $0x8] sm:$0xff] %v1094
                %v1096 = vld [vmem:[%s1090 + $0x10] sm:$0xff]
                %1097 = vst [vmem:[%s1091 + $0x20] sm:$0xff] %v1096
                %v1098 = vld [vmem:[%s1090 + $0x18] sm:$0xff]
                %1099 = vst [vmem:[%s1091 + $0x28] sm:$0xff] %v1098
                %v1100 = vld [vmem:[%s1090 + $0x20] sm:$0xff]
                %1101 = vst [vmem:[%s1091 + $0x40] sm:$0xff] %v1100
                %v1102 = vld [vmem:[%s1090 + $0x28] sm:$0xff]
                %1103 = vst [vmem:[%s1091 + $0x48] sm:$0xff] %v1102
                %v1104 = vld [vmem:[%s1090 + $0x30] sm:$0xff]
                %1105 = vst [vmem:[%s1091 + $0x60] sm:$0xff] %v1104
                %v1106 = vld [vmem:[%s1090 + $0x38] sm:$0xff]
                %1107 = vst [vmem:[%s1091 + $0x68] sm:$0xff] %v1106
                %v1108 = vld [vmem:[%s1090 + $0x40] sm:$0xff]
                %1109 = vst [vmem:[%s1091 + $0x80] sm:$0xff] %v1108
                %v1110 = vld [vmem:[%s1090 + $0x48] sm:$0xff]
                %1111 = vst [vmem:[%s1091 + $0x88] sm:$0xff] %v1110
                %v1112 = vld [vmem:[%s1090 + $0x50] sm:$0xff]
                %1113 = vst [vmem:[%s1091 + $0xa0] sm:$0xff] %v1112
                %v1114 = vld [vmem:[%s1090 + $0x58] sm:$0xff]
                %1115 = vst [vmem:[%s1091 + $0xa8] sm:$0xff] %v1114
                %v1116 = vld [vmem:[%s1090 + $0x60] sm:$0xff]
                %1117 = vst [vmem:[%s1091 + $0xc0] sm:$0xff] %v1116
                %v1118 = vld [vmem:[%s1090 + $0x68] sm:$0xff]
                %1119 = vst [vmem:[%s1091 + $0xc8] sm:$0xff] %v1118
                %v1120 = vld [vmem:[%s1090 + $0x70] sm:$0xff]
                %1121 = vst [vmem:[%s1091 + $0xe0] sm:$0xff] %v1120
                %v1122 = vld [vmem:[%s1090 + $0x78] sm:$0xff]
                %1123 = vst [vmem:[%s1091 + $0xe8] sm:$0xff] %v1122
              $region160: #{lightgcn_forward.12} parent=154 // loop_footer
                %s1089 = sadd.s32 1, %s1085
              $region161: #{lightgcn_forward.12} parent=154 // loop_footer_branch
                %1084 = sbr.rel target = $region157
              $region162: #{lightgcn_forward.12} parent=154 // loop_exit
                _
            $region155: #{lightgcn_forward.12} parent=150 // pred_fallthru
              _
            // Predicated region
            $region163: #{lightgcn_forward.12} parent=150 // pred_check
              _
            $region164: #{lightgcn_forward.12} parent=150 // pred_check_branch
              %1125 = sbr.rel target = $region166
            $region165: #{lightgcn_forward.12} parent=150 // pred_region
              _
            $region166: #{lightgcn_forward.12} parent=150 // pred_fallthru
              _
          $region151: #{lightgcn_forward.12} parent=146 // pred_fallthru
            _
          %1126 = vnop
        $region147: #{lightgcn_forward.12} parent=118 // pred_fallthru
          _
      $region119: #{lightgcn_forward.12} parent=5 // pred_fallthru
        _
      %p1127 = scmp.le.s32.totalorder 2, %s14
      // Predicated region
      $region167: #{lightgcn_forward.12} parent=5 // pred_check
        %p1128 = pneg %p1127
      $region168: #{lightgcn_forward.12} parent=5 // pred_check_branch
        %1130 = sbr.rel (%p1128) target = $region170
      $region169: #{lightgcn_forward.12} parent=5 // pred_region
        %s1131 = ssub.s32 %s14, 2
        // Predicated region
        $region171: #{lightgcn_forward.12} parent=169 // pred_check
          %p1132 = pneg %p135
        $region172: #{lightgcn_forward.12} parent=169 // pred_check_branch
          %1134 = sbr.rel (%p1132) target = $region174
        $region173: #{lightgcn_forward.12} parent=169 // pred_region
          %s1135 = sand.u32 %s120, 1
          %s1136 = scalar_lea.sflag [#allocation7], %s1135
          %s1137 = sand.u32 %s120, 1
          %s1138 = smul.addr %s1137, 64
          %s1139 = scalar_lea.vmem [#allocation6], %s1138
          %1141 = dma.done %s1136, 1024
        $region174: #{lightgcn_forward.12} parent=169 // pred_fallthru
          _
        // Predicated region
        $region175: #{lightgcn_forward.12} parent=169 // pred_check
          %p1142 = pneg %p161
        $region176: #{lightgcn_forward.12} parent=169 // pred_check_branch
          %1144 = sbr.rel (%p1142) target = $region178
        $region177: #{lightgcn_forward.12} parent=169 // pred_region
          %s1145 = sand.u32 %s146, 1
          %s1146 = sand.u32 %s146, 1
          %s1147 = smul.addr %s1146, 128
          %s1148 = scalar_lea.vmem [#allocation8], %s1147
        $region178: #{lightgcn_forward.12} parent=169 // pred_fallthru
          _
      $region170: #{lightgcn_forward.12} parent=5 // pred_fallthru
        _
    $region6: #{lightgcn_forward.12} parent=1 // loop_footer
      %s18 = sadd.s32 1, %s14
    $region7: #{lightgcn_forward.12} parent=1 // loop_footer_branch
      %13 = sbr.rel target = $region3
    $region8: #{lightgcn_forward.12} parent=1 // loop_exit
      _
    %1149 = vsyncpa [#allocation7], 1
    %s1150 = scalar_lea.sflag [#allocation7], 1
    %1151 = vsyncpa %s1150, 1

// kernel: lightgcn_forward.7
$region0: #{lightgcn_forward.7}
  #allocation0 [shape = 'u32[]', space=smem, size = 0x4, offset = 0x4, fixed_abs, tag = 'smem constant byte address 0x4 - core index']
  #allocation1 [shape = 'u32[72,128]{1,0:T(1,128)}', space=vmem, size = 0x9000, scoped, tag = 'internal scratch']
  #allocation2 [shape = 'f32[64,256]{1,0:T(8,128)}', space=vmem, size = 0x10000, scoped, tag = 'scratch operand']
  %s0 = inlined_call_operand.vmem [shape: bf16[64,512], index: 0, kind: input, shape index: {}]
  %s1 = inlined_call_operand.vmem [shape: bf16[512,512], index: 1, kind: input, shape index: {}]
  %s2 = inlined_call_operand.vmem [shape: f32[64,512], index: 2, kind: input, shape index: {}, may-alias: {2,4}]
  %s3 = inlined_call_operand.vmem [shape: bf16[64,512], index: 3, kind: output, shape index: {0}]
  %s4 = inlined_call_operand.vmem [shape: f32[64,512], index: 4, kind: output, shape index: {1}, may-alias: {2,4}]
  %5 = xla_tuple %s3, %s4
  %s6 = sld [smem:[#allocation0]]
  $region213: #{lightgcn_forward.7} parent=0
    _
  %s8 = ssub.s32 1, %s6
  %s9 = scalar_select 0, %s8, %s6
  $region1: #{lightgcn_forward.7} parent=0
    #allocation3 [shape = 'u8[65536]{0}', space=vmem, size = 0x10000, scoped, tag = 'input window, operand 0']
    #allocation4 [shape = 'u8[262144]{0}', space=vmem, size = 0x40000, scoped, tag = 'input window, operand 1']
    #allocation5 [shape = 'u8[131072]{0}', space=vmem, size = 0x20000, scoped, tag = 'input window, operand 2']
    #allocation6 [shape = 'u8[65536]{0}', space=vmem, size = 0x10000, scoped, tag = 'output window, operand 0']
    #allocation7 [shape = 'u8[131072]{0}', space=vmem, size = 0x20000, scoped, tag = 'output window, operand 1']
    loop: start=0, step=1, limit=6
    $region2: #{lightgcn_forward.7} parent=1 // loop_pre_header
      _
    $region3: #{lightgcn_forward.7} parent=1 // loop_header
      %s11 = sphi 0, %s15
      %p12 = scmp.ge.s32.totalorder %s11, 6
      %s18 = sphi 0, %s30
      %s19 = sphi 0, %s26
      %s20 = sphi 0, %s18
      %s21 = sphi 0, %s19
      %s22 = sphi 0, %s20
      %s23 = sphi 0, %s21
      %s33 = sphi 0, %s35
      %s36 = sphi 0, %s33
      %s37 = sphi 0, %s36
      %s53 = sphi 0, %s37
      %s61 = sphi 0, %s63
      %s64 = sphi 0, %s61
      %s65 = sphi 0, %s64
      %s81 = sphi 0, %s65
      %s87 = sphi 0, %s89
      %s90 = sphi 0, %s87
      %s91 = sphi 0, %s90
      %s107 = sphi 0, %s91
      %s113 = sphi 0, %s115
      %s116 = sphi 0, %s113
      %s117 = sphi 0, %s116
      %s133 = sphi 0, %s117
      %s139 = sphi 0, %s141
      %s142 = sphi 0, %s139
      %s143 = sphi 0, %s142
      %s159 = sphi 0, %s143
    $region4: #{lightgcn_forward.7} parent=1 // loop_header_branch
      %14 = sbr.rel (%p12) target = $region8
    $region5: #{lightgcn_forward.7} parent=1 // loop_body
      %s16 = ssub.s32 %s11, 1
      %s17 = ssub.s32 %s11, 2
      %s24 = sadd.s32 1, %s19
      %p25 = scmp.ge.s32.totalorder %s24, 2
      %s26 = scalar_select %p25, 0, %s24
      %s27 = sadd.s32 1, %s18
      %s28 = scalar_select %p25, %s27, %s18
      %p29 = scmp.ge.s32.totalorder %s28, 2
      %s30 = scalar_select %p29, 0, %s28
      %s31 = ssub.s32 %s19, %s26
      %p32 = scmp.eq.s32.totalorder %s31, 0
      %s34 = sadd.s32 %s33, 1
      %s35 = scalar_select %p32, %s33, %s34
      %p38 = pneg %p32
      %p39 = scmp.eq.s32.totalorder %s11, 3
      %p40 = por %p38, %p39
      %p41 = scmp.ne.s32.totalorder %s33, %s36
      %p42 = scmp.eq.s32.totalorder %s11, 0
      %p43 = por %p41, %p42
      %p44 = scmp.ne.s32.totalorder %s33, %s36
      %p45 = scmp.eq.s32.totalorder %s16, 3
      %p46 = por %p44, %p45
      %p47 = scmp.ne.s32.totalorder %s36, %s37
      %p48 = scmp.eq.s32.totalorder %s16, 0
      %p49 = por %p47, %p48
      %p50 = scmp.ne.s32.totalorder %s36, %s37
      %p51 = scmp.eq.s32.totalorder %s17, 3
      %p52 = por %p50, %p51
      %p54 = scmp.ne.s32.totalorder %s37, %s53
      %p55 = scmp.eq.s32.totalorder %s17, 0
      %p56 = por %p54, %p55
      %s57 = ssub.s32 %s19, %s26
      %s58 = ssub.s32 %s18, %s30
      %s59 = sor.u32 %s57, %s58
      %p60 = scmp.eq.s32.totalorder %s59, 0
      %s62 = sadd.s32 %s61, 1
      %s63 = scalar_select %p60, %s61, %s62
      %p66 = pneg %p60
      %p67 = scmp.eq.s32.totalorder %s11, 3
      %p68 = por %p66, %p67
      %p69 = scmp.ne.s32.totalorder %s61, %s64
      %p70 = scmp.eq.s32.totalorder %s11, 0
      %p71 = por %p69, %p70
      %p72 = scmp.ne.s32.totalorder %s61, %s64
      %p73 = scmp.eq.s32.totalorder %s16, 3
      %p74 = por %p72, %p73
      %p75 = scmp.ne.s32.totalorder %s64, %s65
      %p76 = scmp.eq.s32.totalorder %s16, 0
      %p77 = por %p75, %p76
      %p78 = scmp.ne.s32.totalorder %s64, %s65
      %p79 = scmp.eq.s32.totalorder %s17, 3
      %p80 = por %p78, %p79
      %p82 = scmp.ne.s32.totalorder %s65, %s81
      %p83 = scmp.eq.s32.totalorder %s17, 0
      %p84 = por %p82, %p83
      %s85 = ssub.s32 %s18, %s30
      %p86 = scmp.eq.s32.totalorder %s85, 0
      %s88 = sadd.s32 %s87, 1
      %s89 = scalar_select %p86, %s87, %s88
      %p92 = pneg %p86
      %p93 = scmp.eq.s32.totalorder %s11, 3
      %p94 = por %p92, %p93
      %p95 = scmp.ne.s32.totalorder %s87, %s90
      %p96 = scmp.eq.s32.totalorder %s11, 0
      %p97 = por %p95, %p96
      %p98 = scmp.ne.s32.totalorder %s87, %s90
      %p99 = scmp.eq.s32.totalorder %s16, 3
      %p100 = por %p98, %p99
      %p101 = scmp.ne.s32.totalorder %s90, %s91
      %p102 = scmp.eq.s32.totalorder %s16, 0
      %p103 = por %p101, %p102
      %p104 = scmp.ne.s32.totalorder %s90, %s91
      %p105 = scmp.eq.s32.totalorder %s17, 3
      %p106 = por %p104, %p105
      %p108 = scmp.ne.s32.totalorder %s91, %s107
      %p109 = scmp.eq.s32.totalorder %s17, 0
      %p110 = por %p108, %p109
      %s111 = ssub.s32 %s18, %s30
      %p112 = scmp.eq.s32.totalorder %s111, 0
      %s114 = sadd.s32 %s113, 1
      %s115 = scalar_select %p112, %s113, %s114
      %p118 = pneg %p112
      %p119 = scmp.eq.s32.totalorder %s11, 3
      %p120 = por %p118, %p119
      %p121 = scmp.ne.s32.totalorder %s113, %s116
      %p122 = scmp.eq.s32.totalorder %s11, 0
      %p123 = por %p121, %p122
      %p124 = scmp.ne.s32.totalorder %s113, %s116
      %p125 = scmp.eq.s32.totalorder %s16, 3
      %p126 = por %p124, %p125
      %p127 = scmp.ne.s32.totalorder %s116, %s117
      %p128 = scmp.eq.s32.totalorder %s16, 0
      %p129 = por %p127, %p128
      %p130 = scmp.ne.s32.totalorder %s116, %s117
      %p131 = scmp.eq.s32.totalorder %s17, 3
      %p132 = por %p130, %p131
      %p134 = scmp.ne.s32.totalorder %s117, %s133
      %p135 = scmp.eq.s32.totalorder %s17, 0
      %p136 = por %p134, %p135
      %s137 = ssub.s32 %s18, %s30
      %p138 = scmp.eq.s32.totalorder %s137, 0
      %s140 = sadd.s32 %s139, 1
      %s141 = scalar_select %p138, %s139, %s140
      %p144 = pneg %p138
      %p145 = scmp.eq.s32.totalorder %s11, 3
      %p146 = por %p144, %p145
      %p147 = scmp.ne.s32.totalorder %s139, %s142
      %p148 = scmp.eq.s32.totalorder %s11, 0
      %p149 = por %p147, %p148
      %p150 = scmp.ne.s32.totalorder %s139, %s142
      %p151 = scmp.eq.s32.totalorder %s16, 3
      %p152 = por %p150, %p151
      %p153 = scmp.ne.s32.totalorder %s142, %s143
      %p154 = scmp.eq.s32.totalorder %s16, 0
      %p155 = por %p153, %p154
      %p156 = scmp.ne.s32.totalorder %s142, %s143
      %p157 = scmp.eq.s32.totalorder %s17, 3
      %p158 = por %p156, %p157
      %p160 = scmp.ne.s32.totalorder %s143, %s159
      %p161 = scmp.eq.s32.totalorder %s17, 0
      %p162 = por %p160, %p161
      %p163 = scmp.le.s32.totalorder 1, %s11
      %p164 = scmp.lt.s32.totalorder %s11, 5
      %p165 = pnand %p163, %p164
      %p166 = pneg %p165
      // Predicated region
      $region9: #{lightgcn_forward.7} parent=5 // pred_check
        _
      $region10: #{lightgcn_forward.7} parent=5 // pred_check_branch
        %168 = sbr.rel (%p165) target = $region12
      $region11: #{lightgcn_forward.7} parent=5 // pred_region
        %s169 = ssub.s32 %s11, 1
      $region12: #{lightgcn_forward.7} parent=5 // pred_fallthru
        _
      %p170 = scmp.lt.s32.totalorder %s11, 4
      // Predicated region
      $region13: #{lightgcn_forward.7} parent=5 // pred_check
        %p171 = pneg %p170
      $region14: #{lightgcn_forward.7} parent=5 // pred_check_branch
        %173 = sbr.rel (%p171) target = $region16
      $region15: #{lightgcn_forward.7} parent=5 // pred_region
        // Predicated region
        $region17: #{lightgcn_forward.7} parent=15 // pred_check
          %p174 = pneg %p43
        $region18: #{lightgcn_forward.7} parent=15 // pred_check_branch
          %176 = sbr.rel (%p174) target = $region20
        $region19: #{lightgcn_forward.7} parent=15 // pred_region
          %s177 = sand.u32 %s33, 1
          %s178 = sand.u32 %s33, 1
          %s179 = smul.addr %s178, 64
          %s180 = scalar_lea.vmem [#allocation3], %s179
          %s181 = smul.u32 2, %s19
          %s182 = smul.addr %s181, 4
          %s183 = scalar_lea.vmem %s0, %s182
          // Predicated region
          $region21: #{lightgcn_forward.7} parent=19 // pred_check
            _
          $region22: #{lightgcn_forward.7} parent=19 // pred_check_branch
            %185 = sbr.rel (0) target = $region24
          $region23: #{lightgcn_forward.7} parent=19 // pred_region
            // Predicated region
            $region25: #{lightgcn_forward.7} parent=23 // pred_check
              _
            $region26: #{lightgcn_forward.7} parent=23 // pred_check_branch
              %187 = sbr.rel (0) target = $region28
            $region27: #{lightgcn_forward.7} parent=23 // pred_region
              // Predicated region
              $region40: #{lightgcn_forward.7} parent=27 // pred_check
                _
              $region41: #{lightgcn_forward.7} parent=27 // pred_check_branch
                %217 = sbr.rel (0) target = $region43
              $region42: #{lightgcn_forward.7} parent=27 // pred_region
                loop: start=0, step=1, limit=1
                $region44: #{lightgcn_forward.7} parent=42 // loop_pre_header
                  _
                $region45: #{lightgcn_forward.7} parent=42 // loop_header
                  %s219 = sphi 0, %s223
                  %p220 = scmp.ge.s32.totalorder %s219, 1
                  %s224 = sphi %s183, %s183
                  %s225 = sphi %s180, %s180
                $region46: #{lightgcn_forward.7} parent=42 // loop_header_branch
                  %222 = sbr.rel (%p220) target = $region50
                $region47: #{lightgcn_forward.7} parent=42 // loop_body
                  %v226 = vld [vmem:[%s224] sm:$0xff]
                  %227 = vst [vmem:[%s225] sm:$0xff] %v226
                  %v228 = vld [vmem:[%s224 + $0x10] sm:$0xff]
                  %229 = vst [vmem:[%s225 + $0x8] sm:$0xff] %v228
                  %v230 = vld [vmem:[%s224 + $0x20] sm:$0xff]
                  %231 = vst [vmem:[%s225 + $0x10] sm:$0xff] %v230
                  %v232 = vld [vmem:[%s224 + $0x30] sm:$0xff]
                  %233 = vst [vmem:[%s225 + $0x18] sm:$0xff] %v232
                  %v234 = vld [vmem:[%s224 + $0x40] sm:$0xff]
                  %235 = vst [vmem:[%s225 + $0x20] sm:$0xff] %v234
                  %v236 = vld [vmem:[%s224 + $0x50] sm:$0xff]
                  %237 = vst [vmem:[%s225 + $0x28] sm:$0xff] %v236
                  %v238 = vld [vmem:[%s224 + $0x60] sm:$0xff]
                  %239 = vst [vmem:[%s225 + $0x30] sm:$0xff] %v238
                  %v240 = vld [vmem:[%s224 + $0x70] sm:$0xff]
                  %241 = vst [vmem:[%s225 + $0x38] sm:$0xff] %v240
                $region48: #{lightgcn_forward.7} parent=42 // loop_footer
                  %s223 = sadd.s32 1, %s219
                $region49: #{lightgcn_forward.7} parent=42 // loop_footer_branch
                  %218 = sbr.rel target = $region45
                $region50: #{lightgcn_forward.7} parent=42 // loop_exit
                  _
              $region43: #{lightgcn_forward.7} parent=27 // pred_fallthru
                _
              // Predicated region
              $region51: #{lightgcn_forward.7} parent=27 // pred_check
                _
              $region52: #{lightgcn_forward.7} parent=27 // pred_check_branch
                %243 = sbr.rel target = $region54
              $region53: #{lightgcn_forward.7} parent=27 // pred_region
                _
              $region54: #{lightgcn_forward.7} parent=27 // pred_fallthru
                _
            $region28: #{lightgcn_forward.7} parent=23 // pred_fallthru
              _
            // Predicated region
            $region29: #{lightgcn_forward.7} parent=23 // pred_check
              _
            $region30: #{lightgcn_forward.7} parent=23 // pred_check_branch
              %189 = sbr.rel target = $region32
            $region31: #{lightgcn_forward.7} parent=23 // pred_region
              %s191 = ssub.s32 256, 1
              loop: start=0, step=1, limit=1
              $region33: #{lightgcn_forward.7} parent=31 // loop_pre_header
                _
              $region34: #{lightgcn_forward.7} parent=31 // loop_header
                %s193 = sphi 0, %s197
                %p194 = scmp.ge.s32.totalorder %s193, 1
                %s198 = sphi %s183, %s183
                %s199 = sphi %s180, %s180
              $region35: #{lightgcn_forward.7} parent=31 // loop_header_branch
                %196 = sbr.rel (%p194) target = $region39
              $region36: #{lightgcn_forward.7} parent=31 // loop_body
                %v200 = vld [vmem:[%s198] sm:%s191]
                %201 = vst [vmem:[%s199] sm:%s191] %v200
                %v202 = vld [vmem:[%s198 + $0x10] sm:%s191]
                %203 = vst [vmem:[%s199 + $0x8] sm:%s191] %v202
                %v204 = vld [vmem:[%s198 + $0x20] sm:%s191]
                %205 = vst [vmem:[%s199 + $0x10] sm:%s191] %v204
                %v206 = vld [vmem:[%s198 + $0x30] sm:%s191]
                %207 = vst [vmem:[%s199 + $0x18] sm:%s191] %v206
                %v208 = vld [vmem:[%s198 + $0x40] sm:%s191]
                %209 = vst [vmem:[%s199 + $0x20] sm:%s191] %v208
                %v210 = vld [vmem:[%s198 + $0x50] sm:%s191]
                %211 = vst [vmem:[%s199 + $0x28] sm:%s191] %v210
                %v212 = vld [vmem:[%s198 + $0x60] sm:%s191]
                %213 = vst [vmem:[%s199 + $0x30] sm:%s191] %v212
                %v214 = vld [vmem:[%s198 + $0x70] sm:%s191]
                %215 = vst [vmem:[%s199 + $0x38] sm:%s191] %v214
              $region37: #{lightgcn_forward.7} parent=31 // loop_footer
                %s197 = sadd.s32 1, %s193
              $region38: #{lightgcn_forward.7} parent=31 // loop_footer_branch
                %192 = sbr.rel target = $region34
              $region39: #{lightgcn_forward.7} parent=31 // loop_exit
                _
            $region32: #{lightgcn_forward.7} parent=23 // pred_fallthru
              _
          $region24: #{lightgcn_forward.7} parent=19 // pred_fallthru
            _
          %244 = vnop
        $region20: #{lightgcn_forward.7} parent=15 // pred_fallthru
          _
        // Predicated region
        $region55: #{lightgcn_forward.7} parent=15 // pred_check
          %p245 = pneg %p71
        $region56: #{lightgcn_forward.7} parent=15 // pred_check_branch
          %247 = sbr.rel (%p245) target = $region58
        $region57: #{lightgcn_forward.7} parent=15 // pred_region
          %s248 = sand.u32 %s61, 1
          %s249 = sand.u32 %s61, 1
          %s250 = smul.addr %s249, 256
          %s251 = scalar_lea.vmem [#allocation4], %s250
          %s252 = smul.u32 32, %s19
          %s253 = smul.u32 2, %s18
          %s254 = smul.addr %s252, 4
          %s255 = sadd.s32 %s253, %s254
          %s256 = smul.addr %s255, 4
          %s257 = scalar_lea.vmem %s1, %s256
          // Predicated region
          $region59: #{lightgcn_forward.7} parent=57 // pred_check
            _
          $region60: #{lightgcn_forward.7} parent=57 // pred_check_branch
            %259 = sbr.rel (0) target = $region62
          $region61: #{lightgcn_forward.7} parent=57 // pred_region
            // Predicated region
            $region63: #{lightgcn_forward.7} parent=61 // pred_check
              _
            $region64: #{lightgcn_forward.7} parent=61 // pred_check_branch
              %261 = sbr.rel (0) target = $region66
            $region65: #{lightgcn_forward.7} parent=61 // pred_region
              // Predicated region
              $region78: #{lightgcn_forward.7} parent=65 // pred_check
                _
              $region79: #{lightgcn_forward.7} parent=65 // pred_check_branch
                %339 = sbr.rel (0) target = $region81
              $region80: #{lightgcn_forward.7} parent=65 // pred_region
                loop: start=0, step=1, limit=1
                $region82: #{lightgcn_forward.7} parent=80 // loop_pre_header
                  _
                $region83: #{lightgcn_forward.7} parent=80 // loop_header
                  %s341 = sphi 0, %s345
                  %p342 = scmp.ge.s32.totalorder %s341, 1
                  %s346 = sphi %s257, %s257
                  %s347 = sphi %s251, %s251
                $region84: #{lightgcn_forward.7} parent=80 // loop_header_branch
                  %344 = sbr.rel (%p342) target = $region88
                $region85: #{lightgcn_forward.7} parent=80 // loop_body
                  %v348 = vld [vmem:[%s346] sm:$0xff]
                  %349 = vst [vmem:[%s347] sm:$0xff] %v348
                  %v350 = vld [vmem:[%s346 + $0x10] sm:$0xff]
                  %351 = vst [vmem:[%s347 + $0x8] sm:$0xff] %v350
                  %v352 = vld [vmem:[%s346 + $0x20] sm:$0xff]
                  %353 = vst [vmem:[%s347 + $0x10] sm:$0xff] %v352
                  %v354 = vld [vmem:[%s346 + $0x30] sm:$0xff]
                  %355 = vst [vmem:[%s347 + $0x18] sm:$0xff] %v354
                  %v356 = vld [vmem:[%s346 + $0x40] sm:$0xff]
                  %357 = vst [vmem:[%s347 + $0x20] sm:$0xff] %v356
                  %v358 = vld [vmem:[%s346 + $0x50] sm:$0xff]
                  %359 = vst [vmem:[%s347 + $0x28] sm:$0xff] %v358
                  %v360 = vld [vmem:[%s346 + $0x60] sm:$0xff]
                  %361 = vst [vmem:[%s347 + $0x30] sm:$0xff] %v360
                  %v362 = vld [vmem:[%s346 + $0x70] sm:$0xff]
                  %363 = vst [vmem:[%s347 + $0x38] sm:$0xff] %v362
                  %v364 = vld [vmem:[%s346 + $0x80] sm:$0xff]
                  %365 = vst [vmem:[%s347 + $0x40] sm:$0xff] %v364
                  %v366 = vld [vmem:[%s346 + $0x90] sm:$0xff]
                  %367 = vst [vmem:[%s347 + $0x48] sm:$0xff] %v366
                  %v368 = vld [vmem:[%s346 + $0xa0] sm:$0xff]
                  %369 = vst [vmem:[%s347 + $0x50] sm:$0xff] %v368
                  %v370 = vld [vmem:[%s346 + $0xb0] sm:$0xff]
                  %371 = vst [vmem:[%s347 + $0x58] sm:$0xff] %v370
                  %v372 = vld [vmem:[%s346 + $0xc0] sm:$0xff]
                  %373 = vst [vmem:[%s347 + $0x60] sm:$0xff] %v372
                  %v374 = vld [vmem:[%s346 + $0xd0] sm:$0xff]
                  %375 = vst [vmem:[%s347 + $0x68] sm:$0xff] %v374
                  %v376 = vld [vmem:[%s346 + $0xe0] sm:$0xff]
                  %377 = vst [vmem:[%s347 + $0x70] sm:$0xff] %v376
                  %v378 = vld [vmem:[%s346 + $0xf0] sm:$0xff]
                  %379 = vst [vmem:[%s347 + $0x78] sm:$0xff] %v378
                  %v380 = vld [vmem:[%s346 + $0x100] sm:$0xff]
                  %381 = vst [vmem:[%s347 + $0x80] sm:$0xff] %v380
                  %v382 = vld [vmem:[%s346 + $0x110] sm:$0xff]
                  %383 = vst [vmem:[%s347 + $0x88] sm:$0xff] %v382
                  %v384 = vld [vmem:[%s346 + $0x120] sm:$0xff]
                  %385 = vst [vmem:[%s347 + $0x90] sm:$0xff] %v384
                  %v386 = vld [vmem:[%s346 + $0x130] sm:$0xff]
                  %387 = vst [vmem:[%s347 + $0x98] sm:$0xff] %v386
                  %v388 = vld [vmem:[%s346 + $0x140] sm:$0xff]
                  %389 = vst [vmem:[%s347 + $0xa0] sm:$0xff] %v388
                  %v390 = vld [vmem:[%s346 + $0x150] sm:$0xff]
                  %391 = vst [vmem:[%s347 + $0xa8] sm:$0xff] %v390
                  %v392 = vld [vmem:[%s346 + $0x160] sm:$0xff]
                  %393 = vst [vmem:[%s347 + $0xb0] sm:$0xff] %v392
                  %v394 = vld [vmem:[%s346 + $0x170] sm:$0xff]
                  %395 = vst [vmem:[%s347 + $0xb8] sm:$0xff] %v394
                  %v396 = vld [vmem:[%s346 + $0x180] sm:$0xff]
                  %397 = vst [vmem:[%s347 + $0xc0] sm:$0xff] %v396
                  %v398 = vld [vmem:[%s346 + $0x190] sm:$0xff]
                  %399 = vst [vmem:[%s347 + $0xc8] sm:$0xff] %v398
                  %v400 = vld [vmem:[%s346 + $0x1a0] sm:$0xff]
                  %401 = vst [vmem:[%s347 + $0xd0] sm:$0xff] %v400
                  %v402 = vld [vmem:[%s346 + $0x1b0] sm:$0xff]
                  %403 = vst [vmem:[%s347 + $0xd8] sm:$0xff] %v402
                  %v404 = vld [vmem:[%s346 + $0x1c0] sm:$0xff]
                  %405 = vst [vmem:[%s347 + $0xe0] sm:$0xff] %v404
                  %v406 = vld [vmem:[%s346 + $0x1d0] sm:$0xff]
                  %407 = vst [vmem:[%s347 + $0xe8] sm:$0xff] %v406
                  %v408 = vld [vmem:[%s346 + $0x1e0] sm:$0xff]
                  %409 = vst [vmem:[%s347 + $0xf0] sm:$0xff] %v408
                  %v410 = vld [vmem:[%s346 + $0x1f0] sm:$0xff]
                  %411 = vst [vmem:[%s347 + $0xf8] sm:$0xff] %v410
                $region86: #{lightgcn_forward.7} parent=80 // loop_footer
                  %s345 = sadd.s32 1, %s341
                $region87: #{lightgcn_forward.7} parent=80 // loop_footer_branch
                  %340 = sbr.rel target = $region83
                $region88: #{lightgcn_forward.7} parent=80 // loop_exit
                  _
              $region81: #{lightgcn_forward.7} parent=65 // pred_fallthru
                _
              // Predicated region
              $region89: #{lightgcn_forward.7} parent=65 // pred_check
                _
              $region90: #{lightgcn_forward.7} parent=65 // pred_check_branch
                %413 = sbr.rel target = $region92
              $region91: #{lightgcn_forward.7} parent=65 // pred_region
                _
              $region92: #{lightgcn_forward.7} parent=65 // pred_fallthru
                _
            $region66: #{lightgcn_forward.7} parent=61 // pred_fallthru
              _
            // Predicated region
            $region67: #{lightgcn_forward.7} parent=61 // pred_check
              _
            $region68: #{lightgcn_forward.7} parent=61 // pred_check_branch
              %263 = sbr.rel target = $region70
            $region69: #{lightgcn_forward.7} parent=61 // pred_region
              %s265 = ssub.s32 256, 1
              loop: start=0, step=1, limit=1
              $region71: #{lightgcn_forward.7} parent=69 // loop_pre_header
                _
              $region72: #{lightgcn_forward.7} parent=69 // loop_header
                %s267 = sphi 0, %s271
                %p268 = scmp.ge.s32.totalorder %s267, 1
                %s272 = sphi %s257, %s257
                %s273 = sphi %s251, %s251
              $region73: #{lightgcn_forward.7} parent=69 // loop_header_branch
                %270 = sbr.rel (%p268) target = $region77
              $region74: #{lightgcn_forward.7} parent=69 // loop_body
                %v274 = vld [vmem:[%s272] sm:%s265]
                %275 = vst [vmem:[%s273] sm:%s265] %v274
                %v276 = vld [vmem:[%s272 + $0x10] sm:%s265]
                %277 = vst [vmem:[%s273 + $0x8] sm:%s265] %v276
                %v278 = vld [vmem:[%s272 + $0x20] sm:%s265]
                %279 = vst [vmem:[%s273 + $0x10] sm:%s265] %v278
                %v280 = vld [vmem:[%s272 + $0x30] sm:%s265]
                %281 = vst [vmem:[%s273 + $0x18] sm:%s265] %v280
                %v282 = vld [vmem:[%s272 + $0x40] sm:%s265]
                %283 = vst [vmem:[%s273 + $0x20] sm:%s265] %v282
                %v284 = vld [vmem:[%s272 + $0x50] sm:%s265]
                %285 = vst [vmem:[%s273 + $0x28] sm:%s265] %v284
                %v286 = vld [vmem:[%s272 + $0x60] sm:%s265]
                %287 = vst [vmem:[%s273 + $0x30] sm:%s265] %v286
                %v288 = vld [vmem:[%s272 + $0x70] sm:%s265]
                %289 = vst [vmem:[%s273 + $0x38] sm:%s265] %v288
                %v290 = vld [vmem:[%s272 + $0x80] sm:%s265]
                %291 = vst [vmem:[%s273 + $0x40] sm:%s265] %v290
                %v292 = vld [vmem:[%s272 + $0x90] sm:%s265]
                %293 = vst [vmem:[%s273 + $0x48] sm:%s265] %v292
                %v294 = vld [vmem:[%s272 + $0xa0] sm:%s265]
                %295 = vst [vmem:[%s273 + $0x50] sm:%s265] %v294
                %v296 = vld [vmem:[%s272 + $0xb0] sm:%s265]
                %297 = vst [vmem:[%s273 + $0x58] sm:%s265] %v296
                %v298 = vld [vmem:[%s272 + $0xc0] sm:%s265]
                %299 = vst [vmem:[%s273 + $0x60] sm:%s265] %v298
                %v300 = vld [vmem:[%s272 + $0xd0] sm:%s265]
                %301 = vst [vmem:[%s273 + $0x68] sm:%s265] %v300
                %v302 = vld [vmem:[%s272 + $0xe0] sm:%s265]
                %303 = vst [vmem:[%s273 + $0x70] sm:%s265] %v302
                %v304 = vld [vmem:[%s272 + $0xf0] sm:%s265]
                %305 = vst [vmem:[%s273 + $0x78] sm:%s265] %v304
                %v306 = vld [vmem:[%s272 + $0x100] sm:%s265]
                %307 = vst [vmem:[%s273 + $0x80] sm:%s265] %v306
                %v308 = vld [vmem:[%s272 + $0x110] sm:%s265]
                %309 = vst [vmem:[%s273 + $0x88] sm:%s265] %v308
                %v310 = vld [vmem:[%s272 + $0x120] sm:%s265]
                %311 = vst [vmem:[%s273 + $0x90] sm:%s265] %v310
                %v312 = vld [vmem:[%s272 + $0x130] sm:%s265]
                %313 = vst [vmem:[%s273 + $0x98] sm:%s265] %v312
                %v314 = vld [vmem:[%s272 + $0x140] sm:%s265]
                %315 = vst [vmem:[%s273 + $0xa0] sm:%s265] %v314
                %v316 = vld [vmem:[%s272 + $0x150] sm:%s265]
                %317 = vst [vmem:[%s273 + $0xa8] sm:%s265] %v316
                %v318 = vld [vmem:[%s272 + $0x160] sm:%s265]
                %319 = vst [vmem:[%s273 + $0xb0] sm:%s265] %v318
                %v320 = vld [vmem:[%s272 + $0x170] sm:%s265]
                %321 = vst [vmem:[%s273 + $0xb8] sm:%s265] %v320
                %v322 = vld [vmem:[%s272 + $0x180] sm:%s265]
                %323 = vst [vmem:[%s273 + $0xc0] sm:%s265] %v322
                %v324 = vld [vmem:[%s272 + $0x190] sm:%s265]
                %325 = vst [vmem:[%s273 + $0xc8] sm:%s265] %v324
                %v326 = vld [vmem:[%s272 + $0x1a0] sm:%s265]
                %327 = vst [vmem:[%s273 + $0xd0] sm:%s265] %v326
                %v328 = vld [vmem:[%s272 + $0x1b0] sm:%s265]
                %329 = vst [vmem:[%s273 + $0xd8] sm:%s265] %v328
                %v330 = vld [vmem:[%s272 + $0x1c0] sm:%s265]
                %331 = vst [vmem:[%s273 + $0xe0] sm:%s265] %v330
                %v332 = vld [vmem:[%s272 + $0x1d0] sm:%s265]
                %333 = vst [vmem:[%s273 + $0xe8] sm:%s265] %v332
                %v334 = vld [vmem:[%s272 + $0x1e0] sm:%s265]
                %335 = vst [vmem:[%s273 + $0xf0] sm:%s265] %v334
                %v336 = vld [vmem:[%s272 + $0x1f0] sm:%s265]
                %337 = vst [vmem:[%s273 + $0xf8] sm:%s265] %v336
              $region75: #{lightgcn_forward.7} parent=69 // loop_footer
                %s271 = sadd.s32 1, %s267
              $region76: #{lightgcn_forward.7} parent=69 // loop_footer_branch
                %266 = sbr.rel target = $region72
              $region77: #{lightgcn_forward.7} parent=69 // loop_exit
                _
            $region70: #{lightgcn_forward.7} parent=61 // pred_fallthru
              _
          $region62: #{lightgcn_forward.7} parent=57 // pred_fallthru
            _
          %414 = vnop
        $region58: #{lightgcn_forward.7} parent=15 // pred_fallthru
          _
        // Predicated region
        $region93: #{lightgcn_forward.7} parent=15 // pred_check
          %p415 = pneg %p97
        $region94: #{lightgcn_forward.7} parent=15 // pred_check_branch
          %417 = sbr.rel (%p415) target = $region96
        $region95: #{lightgcn_forward.7} parent=15 // pred_region
          %s418 = sand.u32 %s87, 1
          %s419 = sand.u32 %s87, 1
          %s420 = smul.addr %s419, 128
          %s421 = scalar_lea.vmem [#allocation5], %s420
          %s422 = smul.u32 2, %s18
          %s423 = smul.addr %s422, 8
          %s424 = scalar_lea.vmem %s2, %s423
          // Predicated region
          $region97: #{lightgcn_forward.7} parent=95 // pred_check
            _
          $region98: #{lightgcn_forward.7} parent=95 // pred_check_branch
            %426 = sbr.rel (0) target = $region100
          $region99: #{lightgcn_forward.7} parent=95 // pred_region
            // Predicated region
            $region101: #{lightgcn_forward.7} parent=99 // pred_check
              _
            $region102: #{lightgcn_forward.7} parent=99 // pred_check_branch
              %428 = sbr.rel (0) target = $region104
            $region103: #{lightgcn_forward.7} parent=99 // pred_region
              loop: start=0, step=1, limit=1
              $region105: #{lightgcn_forward.7} parent=103 // loop_pre_header
                _
              $region106: #{lightgcn_forward.7} parent=103 // loop_header
                %s430 = sphi 0, %s434
                %p431 = scmp.ge.s32.totalorder %s430, 1
                %s435 = sphi %s424, %s424
                %s436 = sphi %s421, %s421
              $region107: #{lightgcn_forward.7} parent=103 // loop_header_branch
                %433 = sbr.rel (%p431) target = $region111
              $region108: #{lightgcn_forward.7} parent=103 // loop_body
                %v437 = vld [vmem:[%s435] sm:$0xff]
                %438 = vst [vmem:[%s436] sm:$0xff] %v437
                %v439 = vld [vmem:[%s435 + $0x8] sm:$0xff]
                %440 = vst [vmem:[%s436 + $0x8] sm:$0xff] %v439
                %v441 = vld [vmem:[%s435 + $0x20] sm:$0xff]
                %442 = vst [vmem:[%s436 + $0x10] sm:$0xff] %v441
                %v443 = vld [vmem:[%s435 + $0x28] sm:$0xff]
                %444 = vst [vmem:[%s436 + $0x18] sm:$0xff] %v443
                %v445 = vld [vmem:[%s435 + $0x40] sm:$0xff]
                %446 = vst [vmem:[%s436 + $0x20] sm:$0xff] %v445
                %v447 = vld [vmem:[%s435 + $0x48] sm:$0xff]
                %448 = vst [vmem:[%s436 + $0x28] sm:$0xff] %v447
                %v449 = vld [vmem:[%s435 + $0x60] sm:$0xff]
                %450 = vst [vmem:[%s436 + $0x30] sm:$0xff] %v449
                %v451 = vld [vmem:[%s435 + $0x68] sm:$0xff]
                %452 = vst [vmem:[%s436 + $0x38] sm:$0xff] %v451
                %v453 = vld [vmem:[%s435 + $0x80] sm:$0xff]
                %454 = vst [vmem:[%s436 + $0x40] sm:$0xff] %v453
                %v455 = vld [vmem:[%s435 + $0x88] sm:$0xff]
                %456 = vst [vmem:[%s436 + $0x48] sm:$0xff] %v455
                %v457 = vld [vmem:[%s435 + $0xa0] sm:$0xff]
                %458 = vst [vmem:[%s436 + $0x50] sm:$0xff] %v457
                %v459 = vld [vmem:[%s435 + $0xa8] sm:$0xff]
                %460 = vst [vmem:[%s436 + $0x58] sm:$0xff] %v459
                %v461 = vld [vmem:[%s435 + $0xc0] sm:$0xff]
                %462 = vst [vmem:[%s436 + $0x60] sm:$0xff] %v461
                %v463 = vld [vmem:[%s435 + $0xc8] sm:$0xff]
                %464 = vst [vmem:[%s436 + $0x68] sm:$0xff] %v463
                %v465 = vld [vmem:[%s435 + $0xe0] sm:$0xff]
                %466 = vst [vmem:[%s436 + $0x70] sm:$0xff] %v465
                %v467 = vld [vmem:[%s435 + $0xe8] sm:$0xff]
                %468 = vst [vmem:[%s436 + $0x78] sm:$0xff] %v467
              $region109: #{lightgcn_forward.7} parent=103 // loop_footer
                %s434 = sadd.s32 1, %s430
              $region110: #{lightgcn_forward.7} parent=103 // loop_footer_branch
                %429 = sbr.rel target = $region106
              $region111: #{lightgcn_forward.7} parent=103 // loop_exit
                _
            $region104: #{lightgcn_forward.7} parent=99 // pred_fallthru
              _
            // Predicated region
            $region112: #{lightgcn_forward.7} parent=99 // pred_check
              _
            $region113: #{lightgcn_forward.7} parent=99 // pred_check_branch
              %470 = sbr.rel target = $region115
            $region114: #{lightgcn_forward.7} parent=99 // pred_region
              _
            $region115: #{lightgcn_forward.7} parent=99 // pred_fallthru
              _
          $region100: #{lightgcn_forward.7} parent=95 // pred_fallthru
            _
          %471 = vnop
        $region96: #{lightgcn_forward.7} parent=15 // pred_fallthru
          _
      $region16: #{lightgcn_forward.7} parent=5 // pred_fallthru
        _
      %p472 = scmp.le.s32.totalorder 1, %s11
      %p473 = scmp.lt.s32.totalorder %s11, 5
      %p474 = pnand %p472, %p473
      %p475 = pneg %p474
      // Predicated region
      $region116: #{lightgcn_forward.7} parent=5 // pred_check
        _
      $region117: #{lightgcn_forward.7} parent=5 // pred_check_branch
        %477 = sbr.rel (%p474) target = $region119
      $region118: #{lightgcn_forward.7} parent=5 // pred_region
        %s478 = ssub.s32 %s11, 1
        %s479 = sand.u32 %s36, 1
        %s480 = sand.u32 %s36, 1
        %s481 = smul.addr %s480, 64
        %s482 = scalar_lea.vmem [#allocation3], %s481
        // Predicated region
        $region120: #{lightgcn_forward.7} parent=118 // pred_check
          %p483 = pneg %p49
        $region121: #{lightgcn_forward.7} parent=118 // pred_check_branch
          %485 = sbr.rel (%p483) target = $region123
        $region122: #{lightgcn_forward.7} parent=118 // pred_region
          _
        $region123: #{lightgcn_forward.7} parent=118 // pred_fallthru
          _
        %s486 = sand.u32 %s64, 1
        %s487 = sand.u32 %s64, 1
        %s488 = smul.addr %s487, 256
        %s489 = scalar_lea.vmem [#allocation4], %s488
        // Predicated region
        $region124: #{lightgcn_forward.7} parent=118 // pred_check
          %p490 = pneg %p77
        $region125: #{lightgcn_forward.7} parent=118 // pred_check_branch
          %492 = sbr.rel (%p490) target = $region127
        $region126: #{lightgcn_forward.7} parent=118 // pred_region
          _
        $region127: #{lightgcn_forward.7} parent=118 // pred_fallthru
          _
        %s493 = sand.u32 %s90, 1
        %s494 = sand.u32 %s90, 1
        %s495 = smul.addr %s494, 128
        %s496 = scalar_lea.vmem [#allocation5], %s495
        // Predicated region
        $region128: #{lightgcn_forward.7} parent=118 // pred_check
          %p497 = pneg %p103
        $region129: #{lightgcn_forward.7} parent=118 // pred_check_branch
          %499 = sbr.rel (%p497) target = $region131
        $region130: #{lightgcn_forward.7} parent=118 // pred_region
          _
        $region131: #{lightgcn_forward.7} parent=118 // pred_fallthru
          _
        %s500 = sand.u32 %s36, 1
        %s501 = sand.u32 %s36, 1
        %s502 = smul.addr %s501, 64
        %s503 = scalar_lea.vmem [#allocation3], %s502
        %p504 = pneg %p49
        %p505 = pneg %p46
        %s506 = sand.u32 %s64, 1
        %s507 = sand.u32 %s64, 1
        %s508 = smul.addr %s507, 256
        %s509 = scalar_lea.vmem [#allocation4], %s508
        %p510 = pneg %p77
        %p511 = pneg %p74
        %s512 = sand.u32 %s90, 1
        %s513 = sand.u32 %s90, 1
        %s514 = smul.addr %s513, 128
        %s515 = scalar_lea.vmem [#allocation5], %s514
        %p516 = pneg %p103
        %p517 = pneg %p100
        %p518 = pneg %p129
        %p519 = pneg %p126
        %s520 = sand.u32 %s116, 1
        %s521 = sand.u32 %s116, 1
        %s522 = smul.addr %s521, 64
        %s523 = scalar_lea.vmem [#allocation6], %s522
        %p524 = pneg %p155
        %p525 = pneg %p152
        %s526 = sand.u32 %s142, 1
        %s527 = sand.u32 %s142, 1
        %s528 = smul.addr %s527, 128
        %s529 = scalar_lea.vmem [#allocation7], %s528
        %s530 = smul.u32 2, %s21
        %s531 = smul.u32 32, %s21
        %s532 = smul.u32 2, %s20
        %s533 = smul.u32 2, %s20
        %s534 = smul.u32 2, %s20
        %s535 = smul.u32 2, %s20
        %p536 = scmp.eq.s32.totalorder %s21, 0
        // Predicated region
        $region132: #{lightgcn_forward.7} parent=118 // pred_check
          %p537 = pneg %p536
        $region133: #{lightgcn_forward.7} parent=118 // pred_check_branch
          %539 = sbr.rel (%p537) target = $region135
        $region134: #{lightgcn_forward.7} parent=118 // pred_region
          %540 = vst [vmem:[#allocation2] sm:$0xff] 0.0
          %541 = vst [vmem:[#allocation2 + $0x8] sm:$0xff] 0.0
          %542 = vst [vmem:[#allocation2 + $0x10] sm:$0xff] 0.0
          %543 = vst [vmem:[#allocation2 + $0x18] sm:$0xff] 0.0
          %544 = vst [vmem:[#allocation2 + $0x20] sm:$0xff] 0.0
          %545 = vst [vmem:[#allocation2 + $0x28] sm:$0xff] 0.0
          %546 = vst [vmem:[#allocation2 + $0x30] sm:$0xff] 0.0
          %547 = vst [vmem:[#allocation2 + $0x38] sm:$0xff] 0.0
          %548 = vst [vmem:[#allocation2 + $0x40] sm:$0xff] 0.0
          %549 = vst [vmem:[#allocation2 + $0x48] sm:$0xff] 0.0
          %550 = vst [vmem:[#allocation2 + $0x50] sm:$0xff] 0.0
          %551 = vst [vmem:[#allocation2 + $0x58] sm:$0xff] 0.0
          %552 = vst [vmem:[#allocation2 + $0x60] sm:$0xff] 0.0
          %553 = vst [vmem:[#allocation2 + $0x68] sm:$0xff] 0.0
          %554 = vst [vmem:[#allocation2 + $0x70] sm:$0xff] 0.0
          %555 = vst [vmem:[#allocation2 + $0x78] sm:$0xff] 0.0
        $region135: #{lightgcn_forward.7} parent=118 // pred_fallthru
          _
        %v556 = vld [vmem:[#allocation2] sm:$0xff]
        %v557 = vld [vmem:[#allocation2 + $0x8] sm:$0xff]
        %v558 = vld [vmem:[#allocation2 + $0x10] sm:$0xff]
        %v559 = vld [vmem:[#allocation2 + $0x18] sm:$0xff]
        %v560 = vld [vmem:[#allocation2 + $0x20] sm:$0xff]
        %v561 = vld [vmem:[#allocation2 + $0x28] sm:$0xff]
        %v562 = vld [vmem:[#allocation2 + $0x30] sm:$0xff]
        %v563 = vld [vmem:[#allocation2 + $0x38] sm:$0xff]
        %v564 = vld [vmem:[#allocation2 + $0x40] sm:$0xff]
        %v565 = vld [vmem:[#allocation2 + $0x48] sm:$0xff]
        %v566 = vld [vmem:[#allocation2 + $0x50] sm:$0xff]
        %v567 = vld [vmem:[#allocation2 + $0x58] sm:$0xff]
        %v568 = vld [vmem:[#allocation2 + $0x60] sm:$0xff]
        %v569 = vld [vmem:[#allocation2 + $0x68] sm:$0xff]
        %v570 = vld [vmem:[#allocation2 + $0x70] sm:$0xff]
        %v571 = vld [vmem:[#allocation2 + $0x78] sm:$0xff]
        %v572 = vld [vmem:[%s482] sm:$0xff]
        %v573 = vld [vmem:[%s482 + $0x8] sm:$0xff]
        %v574 = vld [vmem:[%s482 + $0x10] sm:$0xff]
        %v575 = vld [vmem:[%s482 + $0x18] sm:$0xff]
        %v576 = vld [vmem:[%s482 + $0x20] sm:$0xff]
        %v577 = vld [vmem:[%s482 + $0x28] sm:$0xff]
        %v578 = vld [vmem:[%s482 + $0x30] sm:$0xff]
        %v579 = vld [vmem:[%s482 + $0x38] sm:$0xff]
        %v580 = vld [vmem:[%s489] sm:$0xff]
        %v581 = vld [vmem:[%s489 + $0x8] sm:$0xff]
        %v582 = vld [vmem:[%s489 + $0x10] sm:$0xff]
        %v583 = vld [vmem:[%s489 + $0x18] sm:$0xff]
        %v584 = vld [vmem:[%s489 + $0x20] sm:$0xff]
        %v585 = vld [vmem:[%s489 + $0x28] sm:$0xff]
        %v586 = vld [vmem:[%s489 + $0x30] sm:$0xff]
        %v587 = vld [vmem:[%s489 + $0x38] sm:$0xff]
        %v588 = vld [vmem:[%s489 + $0x40] sm:$0xff]
        %v589 = vld [vmem:[%s489 + $0x48] sm:$0xff]
        %v590 = vld [vmem:[%s489 + $0x50] sm:$0xff]
        %v591 = vld [vmem:[%s489 + $0x58] sm:$0xff]
        %v592 = vld [vmem:[%s489 + $0x60] sm:$0xff]
        %v593 = vld [vmem:[%s489 + $0x68] sm:$0xff]
        %v594 = vld [vmem:[%s489 + $0x70] sm:$0xff]
        %v595 = vld [vmem:[%s489 + $0x78] sm:$0xff]
        %v596 = vld [vmem:[%s489 + $0x80] sm:$0xff]
        %v597 = vld [vmem:[%s489 + $0x88] sm:$0xff]
        %v598 = vld [vmem:[%s489 + $0x90] sm:$0xff]
        %v599 = vld [vmem:[%s489 + $0x98] sm:$0xff]
        %v600 = vld [vmem:[%s489 + $0xa0] sm:$0xff]
        %v601 = vld [vmem:[%s489 + $0xa8] sm:$0xff]
        %v602 = vld [vmem:[%s489 + $0xb0] sm:$0xff]
        %v603 = vld [vmem:[%s489 + $0xb8] sm:$0xff]
        %v604 = vld [vmem:[%s489 + $0xc0] sm:$0xff]
        %v605 = vld [vmem:[%s489 + $0xc8] sm:$0xff]
        %v606 = vld [vmem:[%s489 + $0xd0] sm:$0xff]
        %v607 = vld [vmem:[%s489 + $0xd8] sm:$0xff]
        %v608 = vld [vmem:[%s489 + $0xe0] sm:$0xff]
        %v609 = vld [vmem:[%s489 + $0xe8] sm:$0xff]
        %v610 = vld [vmem:[%s489 + $0xf0] sm:$0xff]
        %v611 = vld [vmem:[%s489 + $0xf8] sm:$0xff]
        %v620 = vunpack.c.l.b16 %v572
        %v621 = vunpack.c.h.b16 %v572
        %v622 = vunpack.c.l.b16 %v573
        %v623 = vunpack.c.h.b16 %v573
        %v624 = vunpack.c.l.b16 %v574
        %v625 = vunpack.c.h.b16 %v574
        %v626 = vunpack.c.l.b16 %v575
        %v627 = vunpack.c.h.b16 %v575
        %v628 = vunpack.c.l.b16 %v576
        %v629 = vunpack.c.h.b16 %v576
        %v630 = vunpack.c.l.b16 %v577
        %v631 = vunpack.c.h.b16 %v577
        %v632 = vunpack.c.l.b16 %v578
        %v633 = vunpack.c.h.b16 %v578
        %v634 = vunpack.c.l.b16 %v579
        %v635 = vunpack.c.h.b16 %v579
        %v636 = vpack.c.b16 %v622, %v620
        %v637 = vpack.c.b16 %v623, %v621
        %v638 = vpack.c.b16 %v626, %v624
        %v639 = vpack.c.b16 %v627, %v625
        %v640 = vpack.c.b16 %v630, %v628
        %v641 = vpack.c.b16 %v631, %v629
        %v642 = vpack.c.b16 %v634, %v632
        %v643 = vpack.c.b16 %v635, %v633
        %v684 = vunpack.c.l.b16 %v580
        %v685 = vunpack.c.h.b16 %v580
        %v686 = vunpack.c.l.b16 %v581
        %v687 = vunpack.c.h.b16 %v581
        %v688 = vunpack.c.l.b16 %v582
        %v689 = vunpack.c.h.b16 %v582
        %v690 = vunpack.c.l.b16 %v583
        %v691 = vunpack.c.h.b16 %v583
        %v692 = vunpack.c.l.b16 %v584
        %v693 = vunpack.c.h.b16 %v584
        %v694 = vunpack.c.l.b16 %v585
        %v695 = vunpack.c.h.b16 %v585
        %v696 = vunpack.c.l.b16 %v586
        %v697 = vunpack.c.h.b16 %v586
        %v698 = vunpack.c.l.b16 %v587
        %v699 = vunpack.c.h.b16 %v587
        %v700 = vunpack.c.l.b16 %v588
        %v701 = vunpack.c.h.b16 %v588
        %v702 = vunpack.c.l.b16 %v589
        %v703 = vunpack.c.h.b16 %v589
        %v704 = vunpack.c.l.b16 %v590
        %v705 = vunpack.c.h.b16 %v590
        %v706 = vunpack.c.l.b16 %v591
        %v707 = vunpack.c.h.b16 %v591
        %v708 = vunpack.c.l.b16 %v592
        %v709 = vunpack.c.h.b16 %v592
        %v710 = vunpack.c.l.b16 %v593
        %v711 = vunpack.c.h.b16 %v593
        %v712 = vunpack.c.l.b16 %v594
        %v713 = vunpack.c.h.b16 %v594
        %v714 = vunpack.c.l.b16 %v595
        %v715 = vunpack.c.h.b16 %v595
        %v716 = vunpack.c.l.b16 %v596
        %v717 = vunpack.c.h.b16 %v596
        %v718 = vunpack.c.l.b16 %v597
        %v719 = vunpack.c.h.b16 %v597
        %v720 = vunpack.c.l.b16 %v598
        %v721 = vunpack.c.h.b16 %v598
        %v722 = vunpack.c.l.b16 %v599
        %v723 = vunpack.c.h.b16 %v599
        %v724 = vunpack.c.l.b16 %v600
        %v725 = vunpack.c.h.b16 %v600
        %v726 = vunpack.c.l.b16 %v601
        %v727 = vunpack.c.h.b16 %v601
        %v728 = vunpack.c.l.b16 %v602
        %v729 = vunpack.c.h.b16 %v602
        %v730 = vunpack.c.l.b16 %v603
        %v731 = vunpack.c.h.b16 %v603
        %v732 = vunpack.c.l.b16 %v604
        %v733 = vunpack.c.h.b16 %v604
        %v734 = vunpack.c.l.b16 %v605
        %v735 = vunpack.c.h.b16 %v605
        %v736 = vunpack.c.l.b16 %v606
        %v737 = vunpack.c.h.b16 %v606
        %v738 = vunpack.c.l.b16 %v607
        %v739 = vunpack.c.h.b16 %v607
        %v740 = vunpack.c.l.b16 %v608
        %v741 = vunpack.c.h.b16 %v608
        %v742 = vunpack.c.l.b16 %v609
        %v743 = vunpack.c.h.b16 %v609
        %v744 = vunpack.c.l.b16 %v610
        %v745 = vunpack.c.h.b16 %v610
        %v746 = vunpack.c.l.b16 %v611
        %v747 = vunpack.c.h.b16 %v611
        %v748 = vpack.c.b16 %v686, %v684
        %v749 = vpack.c.b16 %v687, %v685
        %v750 = vpack.c.b16 %v690, %v688
        %v751 = vpack.c.b16 %v691, %v689
        %v752 = vpack.c.b16 %v694, %v692
        %v753 = vpack.c.b16 %v695, %v693
        %v754 = vpack.c.b16 %v698, %v696
        %v755 = vpack.c.b16 %v699, %v697
        %v756 = vpack.c.b16 %v702, %v700
        %v757 = vpack.c.b16 %v703, %v701
        %v758 = vpack.c.b16 %v706, %v704
        %v759 = vpack.c.b16 %v707, %v705
        %v760 = vpack.c.b16 %v710, %v708
        %v761 = vpack.c.b16 %v711, %v709
        %v762 = vpack.c.b16 %v714, %v712
        %v763 = vpack.c.b16 %v715, %v713
        %v764 = vpack.c.b16 %v718, %v716
        %v765 = vpack.c.b16 %v719, %v717
        %v766 = vpack.c.b16 %v722, %v720
        %v767 = vpack.c.b16 %v723, %v721
        %v768 = vpack.c.b16 %v726, %v724
        %v769 = vpack.c.b16 %v727, %v725
        %v770 = vpack.c.b16 %v730, %v728
        %v771 = vpack.c.b16 %v731, %v729
        %v772 = vpack.c.b16 %v734, %v732
        %v773 = vpack.c.b16 %v735, %v733
        %v774 = vpack.c.b16 %v738, %v736
        %v775 = vpack.c.b16 %v739, %v737
        %v776 = vpack.c.b16 %v742, %v740
        %v777 = vpack.c.b16 %v743, %v741
        %v778 = vpack.c.b16 %v746, %v744
        %v779 = vpack.c.b16 %v747, %v745
        %812 = vmatpush.bf16.msra.mxu0 %v762
        %813 = vmatpush.bf16.msra.mxu0 %v760
        %814 = vmatpush.bf16.msra.mxu0 %v758
        %815 = vmatpush.bf16.msra.mxu0 %v756
        %816 = vmatpush.bf16.msra.mxu0 %v754
        %817 = vmatpush.bf16.msra.mxu0 %v752
        %818 = vmatpush.bf16.msra.mxu0 %v750
        %819 = vmatpush.bf16.msra.mxu0 %v748
        %820 = vmatmul.bf16.gmra.mxu0 %v636
        %v821 = vpop.f32.mrf.mxu0
        %v822 = vadd.f32 0.0, %v821
        %v823 = vpop.f32.mrf.mxu0
        %v824 = vadd.f32 0.0, %v823
        %825 = vmatmul.bf16.gmra.mxu0 %v638
        %v826 = vpop.f32.mrf.mxu0
        %v827 = vadd.f32 0.0, %v826
        %v828 = vpop.f32.mrf.mxu0
        %v829 = vadd.f32 0.0, %v828
        %830 = vmatmul.bf16.gmra.mxu0 %v640
        %v831 = vpop.f32.mrf.mxu0
        %v832 = vadd.f32 0.0, %v831
        %v833 = vpop.f32.mrf.mxu0
        %v834 = vadd.f32 0.0, %v833
        %835 = vmatmul.bf16.gmra.mxu0 %v642
        %v836 = vpop.f32.mrf.mxu0
        %v837 = vadd.f32 0.0, %v836
        %v838 = vpop.f32.mrf.mxu0
        %v839 = vadd.f32 0.0, %v838
        %840 = vdwg.mxu0
        %841 = vmatpush.bf16.msra.mxu0 %v778
        %842 = vmatpush.bf16.msra.mxu0 %v776
        %843 = vmatpush.bf16.msra.mxu0 %v774
        %844 = vmatpush.bf16.msra.mxu0 %v772
        %845 = vmatpush.bf16.msra.mxu0 %v770
        %846 = vmatpush.bf16.msra.mxu0 %v768
        %847 = vmatpush.bf16.msra.mxu0 %v766
        %848 = vmatpush.bf16.msra.mxu0 %v764
        %849 = vmatmul.bf16.gmra.mxu0 %v637
        %v850 = vpop.f32.mrf.mxu0
        %v851 = vadd.f32 %v822, %v850
        %v852 = vpop.f32.mrf.mxu0
        %v853 = vadd.f32 %v824, %v852
        %854 = vmatmul.bf16.gmra.mxu0 %v639
        %v855 = vpop.f32.mrf.mxu0
        %v856 = vadd.f32 %v827, %v855
        %v857 = vpop.f32.mrf.mxu0
        %v858 = vadd.f32 %v829, %v857
        %859 = vmatmul.bf16.gmra.mxu0 %v641
        %v860 = vpop.f32.mrf.mxu0
        %v861 = vadd.f32 %v832, %v860
        %v862 = vpop.f32.mrf.mxu0
        %v863 = vadd.f32 %v834, %v862
        %864 = vmatmul.bf16.gmra.mxu0 %v643
        %v865 = vpop.f32.mrf.mxu0
        %v866 = vadd.f32 %v837, %v865
        %v867 = vpop.f32.mrf.mxu0
        %v868 = vadd.f32 %v839, %v867
        %869 = vdwg.mxu0
        %870 = vmatpush.bf16.msra.mxu0 %v763
        %871 = vmatpush.bf16.msra.mxu0 %v761
        %872 = vmatpush.bf16.msra.mxu0 %v759
        %873 = vmatpush.bf16.msra.mxu0 %v757
        %874 = vmatpush.bf16.msra.mxu0 %v755
        %875 = vmatpush.bf16.msra.mxu0 %v753
        %876 = vmatpush.bf16.msra.mxu0 %v751
        %877 = vmatpush.bf16.msra.mxu0 %v749
        %878 = vmatmul.bf16.gmra.mxu0 %v636
        %v879 = vpop.f32.mrf.mxu0
        %v880 = vadd.f32 0.0, %v879
        %v881 = vpop.f32.mrf.mxu0
        %v882 = vadd.f32 0.0, %v881
        %883 = vmatmul.bf16.gmra.mxu0 %v638
        %v884 = vpop.f32.mrf.mxu0
        %v885 = vadd.f32 0.0, %v884
        %v886 = vpop.f32.mrf.mxu0
        %v887 = vadd.f32 0.0, %v886
        %888 = vmatmul.bf16.gmra.mxu0 %v640
        %v889 = vpop.f32.mrf.mxu0
        %v890 = vadd.f32 0.0, %v889
        %v891 = vpop.f32.mrf.mxu0
        %v892 = vadd.f32 0.0, %v891
        %893 = vmatmul.bf16.gmra.mxu0 %v642
        %v894 = vpop.f32.mrf.mxu0
        %v895 = vadd.f32 0.0, %v894
        %v896 = vpop.f32.mrf.mxu0
        %v897 = vadd.f32 0.0, %v896
        %898 = vdwg.mxu0
        %899 = vmatpush.bf16.msra.mxu0 %v779
        %900 = vmatpush.bf16.msra.mxu0 %v777
        %901 = vmatpush.bf16.msra.mxu0 %v775
        %902 = vmatpush.bf16.msra.mxu0 %v773
        %903 = vmatpush.bf16.msra.mxu0 %v771
        %904 = vmatpush.bf16.msra.mxu0 %v769
        %905 = vmatpush.bf16.msra.mxu0 %v767
        %906 = vmatpush.bf16.msra.mxu0 %v765
        %907 = vmatmul.bf16.gmra.mxu0 %v637
        %v908 = vpop.f32.mrf.mxu0
        %v909 = vadd.f32 %v880, %v908
        %v910 = vpop.f32.mrf.mxu0
        %v911 = vadd.f32 %v882, %v910
        %912 = vmatmul.bf16.gmra.mxu0 %v639
        %v913 = vpop.f32.mrf.mxu0
        %v914 = vadd.f32 %v885, %v913
        %v915 = vpop.f32.mrf.mxu0
        %v916 = vadd.f32 %v887, %v915
        %917 = vmatmul.bf16.gmra.mxu0 %v641
        %v918 = vpop.f32.mrf.mxu0
        %v919 = vadd.f32 %v890, %v918
        %v920 = vpop.f32.mrf.mxu0
        %v921 = vadd.f32 %v892, %v920
        %922 = vmatmul.bf16.gmra.mxu0 %v643
        %v923 = vpop.f32.mrf.mxu0
        %v924 = vadd.f32 %v895, %v923
        %v925 = vpop.f32.mrf.mxu0
        %v926 = vadd.f32 %v897, %v925
        %927 = vdwg.mxu0
        %v928 = vadd.f32 %v556, %v851
        %v929 = vadd.f32 %v557, %v909
        %v930 = vadd.f32 %v558, %v853
        %v931 = vadd.f32 %v559, %v911
        %v932 = vadd.f32 %v560, %v856
        %v933 = vadd.f32 %v561, %v914
        %v934 = vadd.f32 %v562, %v858
        %v935 = vadd.f32 %v563, %v916
        %v936 = vadd.f32 %v564, %v861
        %v937 = vadd.f32 %v565, %v919
        %v938 = vadd.f32 %v566, %v863
        %v939 = vadd.f32 %v567, %v921
        %v940 = vadd.f32 %v568, %v866
        %v941 = vadd.f32 %v569, %v924
        %v942 = vadd.f32 %v570, %v868
        %v943 = vadd.f32 %v571, %v926
        %944 = vst [vmem:[#allocation2] sm:$0xff] %v928
        %945 = vst [vmem:[#allocation2 + $0x8] sm:$0xff] %v929
        %946 = vst [vmem:[#allocation2 + $0x10] sm:$0xff] %v930
        %947 = vst [vmem:[#allocation2 + $0x18] sm:$0xff] %v931
        %948 = vst [vmem:[#allocation2 + $0x20] sm:$0xff] %v932
        %949 = vst [vmem:[#allocation2 + $0x28] sm:$0xff] %v933
        %950 = vst [vmem:[#allocation2 + $0x30] sm:$0xff] %v934
        %951 = vst [vmem:[#allocation2 + $0x38] sm:$0xff] %v935
        %952 = vst [vmem:[#allocation2 + $0x40] sm:$0xff] %v936
        %953 = vst [vmem:[#allocation2 + $0x48] sm:$0xff] %v937
        %954 = vst [vmem:[#allocation2 + $0x50] sm:$0xff] %v938
        %955 = vst [vmem:[#allocation2 + $0x58] sm:$0xff] %v939
        %956 = vst [vmem:[#allocation2 + $0x60] sm:$0xff] %v940
        %957 = vst [vmem:[#allocation2 + $0x68] sm:$0xff] %v941
        %958 = vst [vmem:[#allocation2 + $0x70] sm:$0xff] %v942
        %959 = vst [vmem:[#allocation2 + $0x78] sm:$0xff] %v943
        %p960 = scmp.eq.s32.totalorder %s21, 1
        // Predicated region
        $region136: #{lightgcn_forward.7} parent=118 // pred_check
          %p961 = pneg %p960
        $region137: #{lightgcn_forward.7} parent=118 // pred_check_branch
          %963 = sbr.rel (%p961) target = $region139
        $region138: #{lightgcn_forward.7} parent=118 // pred_region
          %v964 = vld [vmem:[#allocation2] sm:$0xff]
          %v965 = vld [vmem:[#allocation2 + $0x8] sm:$0xff]
          %v966 = vld [vmem:[#allocation2 + $0x10] sm:$0xff]
          %v967 = vld [vmem:[#allocation2 + $0x18] sm:$0xff]
          %v968 = vld [vmem:[#allocation2 + $0x20] sm:$0xff]
          %v969 = vld [vmem:[#allocation2 + $0x28] sm:$0xff]
          %v970 = vld [vmem:[#allocation2 + $0x30] sm:$0xff]
          %v971 = vld [vmem:[#allocation2 + $0x38] sm:$0xff]
          %v972 = vld [vmem:[#allocation2 + $0x40] sm:$0xff]
          %v973 = vld [vmem:[#allocation2 + $0x48] sm:$0xff]
          %v974 = vld [vmem:[#allocation2 + $0x50] sm:$0xff]
          %v975 = vld [vmem:[#allocation2 + $0x58] sm:$0xff]
          %v976 = vld [vmem:[#allocation2 + $0x60] sm:$0xff]
          %v977 = vld [vmem:[#allocation2 + $0x68] sm:$0xff]
          %v978 = vld [vmem:[#allocation2 + $0x70] sm:$0xff]
          %v979 = vld [vmem:[#allocation2 + $0x78] sm:$0xff]
          %v980 = vpack.c.bf16 %v965, %v964
          %v981 = vpack.c.bf16 %v967, %v966
          %v982 = vpack.c.bf16 %v969, %v968
          %v983 = vpack.c.bf16 %v971, %v970
          %v984 = vpack.c.bf16 %v973, %v972
          %v985 = vpack.c.bf16 %v975, %v974
          %v986 = vpack.c.bf16 %v977, %v976
          %v987 = vpack.c.bf16 %v979, %v978
          %988 = vst [vmem:[%s523] sm:$0xff] %v980
          %989 = vst [vmem:[%s523 + $0x8] sm:$0xff] %v981
          %990 = vst [vmem:[%s523 + $0x10] sm:$0xff] %v982
          %991 = vst [vmem:[%s523 + $0x18] sm:$0xff] %v983
          %992 = vst [vmem:[%s523 + $0x20] sm:$0xff] %v984
          %993 = vst [vmem:[%s523 + $0x28] sm:$0xff] %v985
          %994 = vst [vmem:[%s523 + $0x30] sm:$0xff] %v986
          %995 = vst [vmem:[%s523 + $0x38] sm:$0xff] %v987
          %v996 = vld [vmem:[%s496] sm:$0xff]
          %v997 = vld [vmem:[%s496 + $0x8] sm:$0xff]
          %v998 = vld [vmem:[%s496 + $0x10] sm:$0xff]
          %v999 = vld [vmem:[%s496 + $0x18] sm:$0xff]
          %v1000 = vld [vmem:[%s496 + $0x20] sm:$0xff]
          %v1001 = vld [vmem:[%s496 + $0x28] sm:$0xff]
          %v1002 = vld [vmem:[%s496 + $0x30] sm:$0xff]
          %v1003 = vld [vmem:[%s496 + $0x38] sm:$0xff]
          %v1004 = vld [vmem:[%s496 + $0x40] sm:$0xff]
          %v1005 = vld [vmem:[%s496 + $0x48] sm:$0xff]
          %v1006 = vld [vmem:[%s496 + $0x50] sm:$0xff]
          %v1007 = vld [vmem:[%s496 + $0x58] sm:$0xff]
          %v1008 = vld [vmem:[%s496 + $0x60] sm:$0xff]
          %v1009 = vld [vmem:[%s496 + $0x68] sm:$0xff]
          %v1010 = vld [vmem:[%s496 + $0x70] sm:$0xff]
          %v1011 = vld [vmem:[%s496 + $0x78] sm:$0xff]
          %v1012 = vadd.f32 %v996, %v964
          %v1013 = vadd.f32 %v997, %v965
          %v1014 = vadd.f32 %v998, %v966
          %v1015 = vadd.f32 %v999, %v967
          %v1016 = vadd.f32 %v1000, %v968
          %v1017 = vadd.f32 %v1001, %v969
          %v1018 = vadd.f32 %v1002, %v970
          %v1019 = vadd.f32 %v1003, %v971
          %v1020 = vadd.f32 %v1004, %v972
          %v1021 = vadd.f32 %v1005, %v973
          %v1022 = vadd.f32 %v1006, %v974
          %v1023 = vadd.f32 %v1007, %v975
          %v1024 = vadd.f32 %v1008, %v976
          %v1025 = vadd.f32 %v1009, %v977
          %v1026 = vadd.f32 %v1010, %v978
          %v1027 = vadd.f32 %v1011, %v979
          %1028 = vst [vmem:[%s529] sm:$0xff] %v1012
          %1029 = vst [vmem:[%s529 + $0x8] sm:$0xff] %v1013
          %1030 = vst [vmem:[%s529 + $0x10] sm:$0xff] %v1014
          %1031 = vst [vmem:[%s529 + $0x18] sm:$0xff] %v1015
          %1032 = vst [vmem:[%s529 + $0x20] sm:$0xff] %v1016
          %1033 = vst [vmem:[%s529 + $0x28] sm:$0xff] %v1017
          %1034 = vst [vmem:[%s529 + $0x30] sm:$0xff] %v1018
          %1035 = vst [vmem:[%s529 + $0x38] sm:$0xff] %v1019
          %1036 = vst [vmem:[%s529 + $0x40] sm:$0xff] %v1020
          %1037 = vst [vmem:[%s529 + $0x48] sm:$0xff] %v1021
          %1038 = vst [vmem:[%s529 + $0x50] sm:$0xff] %v1022
          %1039 = vst [vmem:[%s529 + $0x58] sm:$0xff] %v1023
          %1040 = vst [vmem:[%s529 + $0x60] sm:$0xff] %v1024
          %1041 = vst [vmem:[%s529 + $0x68] sm:$0xff] %v1025
          %1042 = vst [vmem:[%s529 + $0x70] sm:$0xff] %v1026
          %1043 = vst [vmem:[%s529 + $0x78] sm:$0xff] %v1027
        $region139: #{lightgcn_forward.7} parent=118 // pred_fallthru
          _
        %s1044 = sand.u32 %s116, 1
        %s1045 = sand.u32 %s116, 1
        %s1046 = smul.addr %s1045, 64
        %s1047 = scalar_lea.vmem [#allocation6], %s1046
        %s1048 = sand.u32 %s142, 1
        %s1049 = sand.u32 %s142, 1
        %s1050 = smul.addr %s1049, 128
        %s1051 = scalar_lea.vmem [#allocation7], %s1050
        // Predicated region
        $region140: #{lightgcn_forward.7} parent=118 // pred_check
          %p1052 = pneg %p126
        $region141: #{lightgcn_forward.7} parent=118 // pred_check_branch
          %1054 = sbr.rel (%p1052) target = $region143
        $region142: #{lightgcn_forward.7} parent=118 // pred_region
          %s1055 = smul.u32 2, %s20
          %s1056 = smul.addr %s1055, 4
          %s1057 = scalar_lea.vmem %s3, %s1056
          // Predicated region
          $region144: #{lightgcn_forward.7} parent=142 // pred_check
            _
          $region145: #{lightgcn_forward.7} parent=142 // pred_check_branch
            %1059 = sbr.rel (0) target = $region147
          $region146: #{lightgcn_forward.7} parent=142 // pred_region
            // Predicated region
            $region148: #{lightgcn_forward.7} parent=146 // pred_check
              _
            $region149: #{lightgcn_forward.7} parent=146 // pred_check_branch
              %1061 = sbr.rel (0) target = $region151
            $region150: #{lightgcn_forward.7} parent=146 // pred_region
              // Predicated region
              $region163: #{lightgcn_forward.7} parent=150 // pred_check
                _
              $region164: #{lightgcn_forward.7} parent=150 // pred_check_branch
                %1091 = sbr.rel (0) target = $region166
              $region165: #{lightgcn_forward.7} parent=150 // pred_region
                loop: start=0, step=1, limit=1
                $region167: #{lightgcn_forward.7} parent=165 // loop_pre_header
                  _
                $region168: #{lightgcn_forward.7} parent=165 // loop_header
                  %s1093 = sphi 0, %s1097
                  %p1094 = scmp.ge.s32.totalorder %s1093, 1
                  %s1098 = sphi %s1047, %s1047
                  %s1099 = sphi %s1057, %s1057
                $region169: #{lightgcn_forward.7} parent=165 // loop_header_branch
                  %1096 = sbr.rel (%p1094) target = $region173
                $region170: #{lightgcn_forward.7} parent=165 // loop_body
                  %v1100 = vld [vmem:[%s1098] sm:$0xff]
                  %1101 = vst [vmem:[%s1099] sm:$0xff] %v1100
                  %v1102 = vld [vmem:[%s1098 + $0x8] sm:$0xff]
                  %1103 = vst [vmem:[%s1099 + $0x10] sm:$0xff] %v1102
                  %v1104 = vld [vmem:[%s1098 + $0x10] sm:$0xff]
                  %1105 = vst [vmem:[%s1099 + $0x20] sm:$0xff] %v1104
                  %v1106 = vld [vmem:[%s1098 + $0x18] sm:$0xff]
                  %1107 = vst [vmem:[%s1099 + $0x30] sm:$0xff] %v1106
                  %v1108 = vld [vmem:[%s1098 + $0x20] sm:$0xff]
                  %1109 = vst [vmem:[%s1099 + $0x40] sm:$0xff] %v1108
                  %v1110 = vld [vmem:[%s1098 + $0x28] sm:$0xff]
                  %1111 = vst [vmem:[%s1099 + $0x50] sm:$0xff] %v1110
                  %v1112 = vld [vmem:[%s1098 + $0x30] sm:$0xff]
                  %1113 = vst [vmem:[%s1099 + $0x60] sm:$0xff] %v1112
                  %v1114 = vld [vmem:[%s1098 + $0x38] sm:$0xff]
                  %1115 = vst [vmem:[%s1099 + $0x70] sm:$0xff] %v1114
                $region171: #{lightgcn_forward.7} parent=165 // loop_footer
                  %s1097 = sadd.s32 1, %s1093
                $region172: #{lightgcn_forward.7} parent=165 // loop_footer_branch
                  %1092 = sbr.rel target = $region168
                $region173: #{lightgcn_forward.7} parent=165 // loop_exit
                  _
              $region166: #{lightgcn_forward.7} parent=150 // pred_fallthru
                _
              // Predicated region
              $region174: #{lightgcn_forward.7} parent=150 // pred_check
                _
              $region175: #{lightgcn_forward.7} parent=150 // pred_check_branch
                %1117 = sbr.rel target = $region177
              $region176: #{lightgcn_forward.7} parent=150 // pred_region
                _
              $region177: #{lightgcn_forward.7} parent=150 // pred_fallthru
                _
            $region151: #{lightgcn_forward.7} parent=146 // pred_fallthru
              _
            // Predicated region
            $region152: #{lightgcn_forward.7} parent=146 // pred_check
              _
            $region153: #{lightgcn_forward.7} parent=146 // pred_check_branch
              %1063 = sbr.rel target = $region155
            $region154: #{lightgcn_forward.7} parent=146 // pred_region
              %s1065 = ssub.s32 256, 1
              loop: start=0, step=1, limit=1
              $region156: #{lightgcn_forward.7} parent=154 // loop_pre_header
                _
              $region157: #{lightgcn_forward.7} parent=154 // loop_header
                %s1067 = sphi 0, %s1071
                %p1068 = scmp.ge.s32.totalorder %s1067, 1
                %s1072 = sphi %s1047, %s1047
                %s1073 = sphi %s1057, %s1057
              $region158: #{lightgcn_forward.7} parent=154 // loop_header_branch
                %1070 = sbr.rel (%p1068) target = $region162
              $region159: #{lightgcn_forward.7} parent=154 // loop_body
                %v1074 = vld [vmem:[%s1072] sm:%s1065]
                %1075 = vst [vmem:[%s1073] sm:%s1065] %v1074
                %v1076 = vld [vmem:[%s1072 + $0x8] sm:%s1065]
                %1077 = vst [vmem:[%s1073 + $0x10] sm:%s1065] %v1076
                %v1078 = vld [vmem:[%s1072 + $0x10] sm:%s1065]
                %1079 = vst [vmem:[%s1073 + $0x20] sm:%s1065] %v1078
                %v1080 = vld [vmem:[%s1072 + $0x18] sm:%s1065]
                %1081 = vst [vmem:[%s1073 + $0x30] sm:%s1065] %v1080
                %v1082 = vld [vmem:[%s1072 + $0x20] sm:%s1065]
                %1083 = vst [vmem:[%s1073 + $0x40] sm:%s1065] %v1082
                %v1084 = vld [vmem:[%s1072 + $0x28] sm:%s1065]
                %1085 = vst [vmem:[%s1073 + $0x50] sm:%s1065] %v1084
                %v1086 = vld [vmem:[%s1072 + $0x30] sm:%s1065]
                %1087 = vst [vmem:[%s1073 + $0x60] sm:%s1065] %v1086
                %v1088 = vld [vmem:[%s1072 + $0x38] sm:%s1065]
                %1089 = vst [vmem:[%s1073 + $0x70] sm:%s1065] %v1088
              $region160: #{lightgcn_forward.7} parent=154 // loop_footer
                %s1071 = sadd.s32 1, %s1067
              $region161: #{lightgcn_forward.7} parent=154 // loop_footer_branch
                %1066 = sbr.rel target = $region157
              $region162: #{lightgcn_forward.7} parent=154 // loop_exit
                _
            $region155: #{lightgcn_forward.7} parent=146 // pred_fallthru
              _
          $region147: #{lightgcn_forward.7} parent=142 // pred_fallthru
            _
          %1118 = vnop
        $region143: #{lightgcn_forward.7} parent=118 // pred_fallthru
          _
        // Predicated region
        $region178: #{lightgcn_forward.7} parent=118 // pred_check
          %p1119 = pneg %p152
        $region179: #{lightgcn_forward.7} parent=118 // pred_check_branch
          %1121 = sbr.rel (%p1119) target = $region181
        $region180: #{lightgcn_forward.7} parent=118 // pred_region
          %s1122 = smul.u32 2, %s20
          %s1123 = smul.addr %s1122, 8
          %s1124 = scalar_lea.vmem %s4, %s1123
          // Predicated region
          $region182: #{lightgcn_forward.7} parent=180 // pred_check
            _
          $region183: #{lightgcn_forward.7} parent=180 // pred_check_branch
            %1126 = sbr.rel (0) target = $region185
          $region184: #{lightgcn_forward.7} parent=180 // pred_region
            // Predicated region
            $region186: #{lightgcn_forward.7} parent=184 // pred_check
              _
            $region187: #{lightgcn_forward.7} parent=184 // pred_check_branch
              %1128 = sbr.rel (0) target = $region189
            $region188: #{lightgcn_forward.7} parent=184 // pred_region
              loop: start=0, step=1, limit=1
              $region190: #{lightgcn_forward.7} parent=188 // loop_pre_header
                _
              $region191: #{lightgcn_forward.7} parent=188 // loop_header
                %s1130 = sphi 0, %s1134
                %p1131 = scmp.ge.s32.totalorder %s1130, 1
                %s1135 = sphi %s1051, %s1051
                %s1136 = sphi %s1124, %s1124
              $region192: #{lightgcn_forward.7} parent=188 // loop_header_branch
                %1133 = sbr.rel (%p1131) target = $region196
              $region193: #{lightgcn_forward.7} parent=188 // loop_body
                %v1137 = vld [vmem:[%s1135] sm:$0xff]
                %1138 = vst [vmem:[%s1136] sm:$0xff] %v1137
                %v1139 = vld [vmem:[%s1135 + $0x8] sm:$0xff]
                %1140 = vst [vmem:[%s1136 + $0x8] sm:$0xff] %v1139
                %v1141 = vld [vmem:[%s1135 + $0x10] sm:$0xff]
                %1142 = vst [vmem:[%s1136 + $0x20] sm:$0xff] %v1141
                %v1143 = vld [vmem:[%s1135 + $0x18] sm:$0xff]
                %1144 = vst [vmem:[%s1136 + $0x28] sm:$0xff] %v1143
                %v1145 = vld [vmem:[%s1135 + $0x20] sm:$0xff]
                %1146 = vst [vmem:[%s1136 + $0x40] sm:$0xff] %v1145
                %v1147 = vld [vmem:[%s1135 + $0x28] sm:$0xff]
                %1148 = vst [vmem:[%s1136 + $0x48] sm:$0xff] %v1147
                %v1149 = vld [vmem:[%s1135 + $0x30] sm:$0xff]
                %1150 = vst [vmem:[%s1136 + $0x60] sm:$0xff] %v1149
                %v1151 = vld [vmem:[%s1135 + $0x38] sm:$0xff]
                %1152 = vst [vmem:[%s1136 + $0x68] sm:$0xff] %v1151
                %v1153 = vld [vmem:[%s1135 + $0x40] sm:$0xff]
                %1154 = vst [vmem:[%s1136 + $0x80] sm:$0xff] %v1153
                %v1155 = vld [vmem:[%s1135 + $0x48] sm:$0xff]
                %1156 = vst [vmem:[%s1136 + $0x88] sm:$0xff] %v1155
                %v1157 = vld [vmem:[%s1135 + $0x50] sm:$0xff]
                %1158 = vst [vmem:[%s1136 + $0xa0] sm:$0xff] %v1157
                %v1159 = vld [vmem:[%s1135 + $0x58] sm:$0xff]
                %1160 = vst [vmem:[%s1136 + $0xa8] sm:$0xff] %v1159
                %v1161 = vld [vmem:[%s1135 + $0x60] sm:$0xff]
                %1162 = vst [vmem:[%s1136 + $0xc0] sm:$0xff] %v1161
                %v1163 = vld [vmem:[%s1135 + $0x68] sm:$0xff]
                %1164 = vst [vmem:[%s1136 + $0xc8] sm:$0xff] %v1163
                %v1165 = vld [vmem:[%s1135 + $0x70] sm:$0xff]
                %1166 = vst [vmem:[%s1136 + $0xe0] sm:$0xff] %v1165
                %v1167 = vld [vmem:[%s1135 + $0x78] sm:$0xff]
                %1168 = vst [vmem:[%s1136 + $0xe8] sm:$0xff] %v1167
              $region194: #{lightgcn_forward.7} parent=188 // loop_footer
                %s1134 = sadd.s32 1, %s1130
              $region195: #{lightgcn_forward.7} parent=188 // loop_footer_branch
                %1129 = sbr.rel target = $region191
              $region196: #{lightgcn_forward.7} parent=188 // loop_exit
                _
            $region189: #{lightgcn_forward.7} parent=184 // pred_fallthru
              _
            // Predicated region
            $region197: #{lightgcn_forward.7} parent=184 // pred_check
              _
            $region198: #{lightgcn_forward.7} parent=184 // pred_check_branch
              %1170 = sbr.rel target = $region200
            $region199: #{lightgcn_forward.7} parent=184 // pred_region
              _
            $region200: #{lightgcn_forward.7} parent=184 // pred_fallthru
              _
          $region185: #{lightgcn_forward.7} parent=180 // pred_fallthru
            _
          %1171 = vnop
        $region181: #{lightgcn_forward.7} parent=118 // pred_fallthru
          _
      $region119: #{lightgcn_forward.7} parent=5 // pred_fallthru
        _
      %p1172 = scmp.le.s32.totalorder 2, %s11
      // Predicated region
      $region201: #{lightgcn_forward.7} parent=5 // pred_check
        %p1173 = pneg %p1172
      $region202: #{lightgcn_forward.7} parent=5 // pred_check_branch
        %1175 = sbr.rel (%p1173) target = $region204
      $region203: #{lightgcn_forward.7} parent=5 // pred_region
        %s1176 = ssub.s32 %s11, 2
        // Predicated region
        $region205: #{lightgcn_forward.7} parent=203 // pred_check
          %p1177 = pneg %p132
        $region206: #{lightgcn_forward.7} parent=203 // pred_check_branch
          %1179 = sbr.rel (%p1177) target = $region208
        $region207: #{lightgcn_forward.7} parent=203 // pred_region
          %s1180 = sand.u32 %s117, 1
          %s1181 = sand.u32 %s117, 1
          %s1182 = smul.addr %s1181, 64
          %s1183 = scalar_lea.vmem [#allocation6], %s1182
        $region208: #{lightgcn_forward.7} parent=203 // pred_fallthru
          _
        // Predicated region
        $region209: #{lightgcn_forward.7} parent=203 // pred_check
          %p1184 = pneg %p158
        $region210: #{lightgcn_forward.7} parent=203 // pred_check_branch
          %1186 = sbr.rel (%p1184) target = $region212
        $region211: #{lightgcn_forward.7} parent=203 // pred_region
          %s1187 = sand.u32 %s143, 1
          %s1188 = sand.u32 %s143, 1
          %s1189 = smul.addr %s1188, 128
          %s1190 = scalar_lea.vmem [#allocation7], %s1189
        $region212: #{lightgcn_forward.7} parent=203 // pred_fallthru
          _
      $region204: #{lightgcn_forward.7} parent=5 // pred_fallthru
        _
    $region6: #{lightgcn_forward.7} parent=1 // loop_footer
      %s15 = sadd.s32 1, %s11
    $region7: #{lightgcn_forward.7} parent=1 // loop_footer_branch
      %10 = sbr.rel target = $region3
    $region8: #{lightgcn_forward.7} parent=1 // loop_exit
      _

</llo_original>
